<compile_context>
chip_gen: v5e
topology: v5e:2x2
jax: 0.10.0
libtpu: 0.0.40
codegen_flags: <defaults>
</compile_context>

<pallas_src>
import jax
import jax.numpy as jnp
from jax import lax
from jax.experimental import pallas as pl
from jax.experimental.pallas import tpu as pltpu

B = 2        # params.batch_size
BP = 8       # batch padded to a full sublane tile
S = 8        # sequence length
E = 32       # params.pretrained_embedding_dim
H = 32       # params.lstm_hidden_dim
FC = 100     # fc out_features
FCP = 128    # FC padded to a full lane tile
NCLS = 5     # out out_features
NP = 128     # NCLS padded to a full lane tile


def _network_kernel(x_ref,                      # (S*BP, 2E)  paired time-major input
                    w_ih_ref, b_ref,            # (2E, 8H), (1, 8H)  gate-interleaved
                    w_hh_ref,                   # (2H, 8H)  block-diag, gate-interleaved
                    sel0_ref, sel1_ref,         # (BP, S) one-hot tag-position masks
                    fc_w_ref, fc_b_ref,         # (4H, FCP), (1, FCP)
                    out_w_ref, out_b_ref,       # (FCP, NP), (1, NP)
                    o_ref):                     # (BP, NP)
    # ---- hoisted input projection: one MXU matmul for both directions + biases ----
    xg = (jnp.dot(x_ref[...], w_ih_ref[...], preferred_element_type=jnp.float32)
          + b_ref[...])                                           # (S*BP, 8H)

    w_hh = w_hh_ref[...]
    sel0 = sel0_ref[...]
    sel1 = sel1_ref[...]

    # lane mask: gate layout [i_f i_b f_f f_b g_f g_b o_f o_b] -> tanh band = [4H, 6H)
    lane = lax.broadcasted_iota(jnp.int32, (BP, 8 * H), 1)
    is_g = (lane >= 4 * H) & (lane < 6 * H)
    scale = jnp.where(is_g, 1.0, 0.5).astype(jnp.float32)

    h_cat = jnp.zeros((BP, 2 * H), jnp.float32)     # [h_f | h_b]
    c_cat = jnp.zeros((BP, 2 * H), jnp.float32)     # [c_f | c_b]
    a_f0 = jnp.zeros((BP, H), jnp.float32)          # h_f at tag 0
    a_b0 = jnp.zeros((BP, H), jnp.float32)          # h_b at tag 0
    a_f1 = jnp.zeros((BP, H), jnp.float32)          # h_f at tag 1
    a_b1 = jnp.zeros((BP, H), jnp.float32)          # h_b at tag 1

    # ---- fused fwd/bwd recurrence: one matmul + one tanh per step, unrolled (S=8) ----
    for t in range(S):
        tb = S - 1 - t                                            # bwd timestep this iter
        g = (jnp.dot(h_cat, w_hh, preferred_element_type=jnp.float32)
             + xg[t * BP:(t + 1) * BP, :])                        # (BP, 8H)
        # single full-width transcendental: sigmoid(x) = 0.5*tanh(x/2) + 0.5
        th = jnp.tanh(g * scale)
        a = jnp.where(is_g, th, 0.5 * th + 0.5)
        i_c = a[:, 0:2 * H]
        f_c = a[:, 2 * H:4 * H]
        g_c = a[:, 4 * H:6 * H]
        o_c = a[:, 6 * H:8 * H]
        c_cat = f_c * c_cat + i_c * g_c
        h_cat = o_c * jnp.tanh(c_cat)

        # in-register masked accumulation of the tagged hidden states (no scratch/gather)
        h_f = h_cat[:, 0:H]
        h_b = h_cat[:, H:2 * H]
        a_f0 = a_f0 + sel0[:, t:t + 1] * h_f
        a_b0 = a_b0 + sel0[:, tb:tb + 1] * h_b
        a_f1 = a_f1 + sel1[:, t:t + 1] * h_f
        a_b1 = a_b1 + sel1[:, tb:tb + 1] * h_b

    # ---- MLP head: one K=128 FC matmul, then lane-dense padded output matmul ----
    fc_in = jnp.concatenate([a_f0, a_b0, a_f1, a_b1], axis=1)     # (BP, 4H) = (8, 128)
    hid = jnp.tanh(jnp.dot(fc_in, fc_w_ref[...], preferred_element_type=jnp.float32)
                   + fc_b_ref[...])                               # (BP, FCP)
    logits = (jnp.dot(hid, out_w_ref[...], preferred_element_type=jnp.float32)
              + out_b_ref[...])                                   # (BP, NP) lane-dense
    o_ref[...] = logits


def init_params(key):
    ks = jax.random.split(key, 12)
    s = 0.1
    return {
        "w_ih_f": jax.random.normal(ks[0], (4 * H, E), jnp.float32) * s,
        "w_hh_f": jax.random.normal(ks[1], (4 * H, H), jnp.float32) * s,
        "b_ih_f": jax.random.normal(ks[2], (4 * H,), jnp.float32) * s,
        "b_hh_f": jax.random.normal(ks[3], (4 * H,), jnp.float32) * s,
        "w_ih_b": jax.random.normal(ks[4], (4 * H, E), jnp.float32) * s,
        "w_hh_b": jax.random.normal(ks[5], (4 * H, H), jnp.float32) * s,
        "b_ih_b": jax.random.normal(ks[6], (4 * H,), jnp.float32) * s,
        "b_hh_b": jax.random.normal(ks[7], (4 * H,), jnp.float32) * s,
        "fc_w": jax.random.normal(ks[8], (FC, 4 * H), jnp.float32) * s,
        "fc_b": jax.random.normal(ks[9], (FC,), jnp.float32) * s,
        "out_w": jax.random.normal(ks[10], (NCLS, FC), jnp.float32) * s,
        "out_b": jax.random.normal(ks[11], (NCLS,), jnp.float32) * s,
    }


def prepare_params(p):
    """One-time weight prep: transpose, gate-interleave, block-diag fuse, pad, combine biases."""
    def interleave(wf, wb):
        # wf, wb: (rows, 4H) with gate blocks [i f g o] -> (rows, 8H) laid out
        # [i_f i_b f_f f_b g_f g_b o_f o_b]
        cols = []
        for k in range(4):
            cols.append(wf[:, k * H:(k + 1) * H])
            cols.append(wb[:, k * H:(k + 1) * H])
        return jnp.concatenate(cols, axis=1)

    zE = jnp.zeros((E, 4 * H), jnp.float32)
    zH = jnp.zeros((H, 4 * H), jnp.float32)
    # rows 0:E drive the forward gates (from x(t)), rows E:2E drive backward gates (from x(S-1-t))
    w_ih_blk = jnp.concatenate([interleave(p["w_ih_f"].T, zE),
                                interleave(zE, p["w_ih_b"].T)], axis=0)      # (2E, 8H)
    # rows 0:H from h_f -> forward gate columns; rows H:2H from h_b -> backward gate columns
    w_hh_blk = jnp.concatenate([interleave(p["w_hh_f"].T, zH),
                                interleave(zH, p["w_hh_b"].T)], axis=0)      # (2H, 8H)
    bf = (p["b_ih_f"] + p["b_hh_f"]).reshape(1, 4 * H)
    bb = (p["b_ih_b"] + p["b_hh_b"]).reshape(1, 4 * H)
    b_all = interleave(bf, bb)                                               # (1, 8H)

    fc_w = jnp.zeros((4 * H, FCP), jnp.float32).at[:, :FC].set(p["fc_w"].T)
    fc_b = jnp.zeros((1, FCP), jnp.float32).at[0, :FC].set(p["fc_b"])
    out_w = jnp.zeros((FCP, NP), jnp.float32).at[:FC, :NCLS].set(p["out_w"].T)
    out_b = jnp.zeros((1, NP), jnp.float32).at[0, :NCLS].set(p["out_b"])
    return {
        "w_ih_blk": w_ih_blk, "b_all": b_all, "w_hh_blk": w_hh_blk,
        "fc_w": fc_w, "fc_b": fc_b, "out_w": out_w, "out_b": out_b,
    }


def network_forward(t, labels, prep):
    # glue: data-dependent tagged-index extraction (mirrors the module's Python loop;
    # assumes exactly two tags per row not in {0, -1}, same as the module's assert).
    mask = (labels != 0) & (labels != -1)
    order = jnp.argsort(jnp.where(mask, 0, 1), axis=1, stable=True)
    idx = order[:, :2].astype(jnp.int32)                                     # (B, 2)
    single_labels = jnp.take_along_axis(labels, idx[:, :1], axis=1)[:, 0].astype(jnp.int32)

    # paired time-major input: row s*BP + b = [x[b, s] | x[b, S-1-s]]; batch padded to 8
    x = t.astype(jnp.float32)
    x_pad = jnp.zeros((BP, S, E), jnp.float32).at[:B].set(x)
    x_tm = jnp.transpose(x_pad, (1, 0, 2))                                   # (S, BP, E)
    x_rev = x_tm[::-1]
    x_pair = jnp.concatenate([x_tm, x_rev], axis=-1).reshape(S * BP, 2 * E)  # (S*BP, 2E)

    # one-hot tag-position masks (padded rows are all-zero -> no OOB, contribute nothing)
    ts_ar = jnp.arange(S, dtype=jnp.int32)[None, :]                          # (1, S)
    sel0 = jnp.zeros((BP, S), jnp.float32).at[:B].set(
        (idx[:, 0:1] == ts_ar).astype(jnp.float32))
    sel1 = jnp.zeros((BP, S), jnp.float32).at[:B].set(
        (idx[:, 1:2] == ts_ar).astype(jnp.float32))

    args = (x_pair, prep["w_ih_blk"], prep["b_all"], prep["w_hh_blk"], sel0, sel1,
            prep["fc_w"], prep["fc_b"], prep["out_w"], prep["out_b"])

    vmem_spec = pl.BlockSpec(memory_space=pltpu.MemorySpace.VMEM)
    logits_pad = pl.pallas_call(
        _network_kernel,
        out_shape=jax.ShapeDtypeStruct((BP, NP), jnp.float32),
        in_specs=[vmem_spec] * len(args),
        out_specs=pl.BlockSpec(memory_space=pltpu.MemorySpace.VMEM),
    )(*args)
    return logits_pad[:B, :NCLS], single_labels


network_forward_jit = jax.jit(network_forward)


# ----------------------- pure-JAX reference for verification -----------------------
def _lstm_dir_ref(x, wih, whh, bih, bhh, reverse):
    h = jnp.zeros((B, H), jnp.float32)
    c = jnp.zeros((B, H), jnp.float32)
    hs = [None] * S
    ts = range(S - 1, -1, -1) if reverse else range(S)
    for t in ts:
        g = x[:, t, :] @ wih.T + h @ whh.T + bih + bhh
        i = jax.nn.sigmoid(g[:, :H]); f = jax.nn.sigmoid(g[:, H:2 * H])
        gg = jnp.tanh(g[:, 2 * H:3 * H]); o = jax.nn.sigmoid(g[:, 3 * H:])
        c = f * c + i * gg
        h = o * jnp.tanh(c)
        hs[t] = h
    return jnp.stack(hs, axis=1)                                  # (B, S, H)


def network_forward_ref(t, labels, p):
    mask = (labels != 0) & (labels != -1)
    order = jnp.argsort(jnp.where(mask, 0, 1), axis=1, stable=True)
    idx = order[:, :2]
    fwd = _lstm_dir_ref(t, p["w_ih_f"], p["w_hh_f"], p["b_ih_f"], p["b_hh_f"], False)
    bwd = _lstm_dir_ref(t, p["w_ih_b"], p["w_hh_b"], p["b_ih_b"], p["b_hh_b"], True)
    ctx = jnp.concatenate([fwd, bwd], axis=-1)                    # (B, S, 2H)
    rows = [jnp.concatenate([ctx[j, idx[j, 0]], ctx[j, idx[j, 1]]], axis=-1)
            for j in range(B)]
    concat = jnp.stack(rows, axis=0)                              # (B, 4H)
    hid = jnp.tanh(concat @ p["fc_w"].T + p["fc_b"])
    return hid @ p["out_w"].T + p["out_b"]


if __name__ == "__main__":
    key = jax.random.PRNGKey(0)
    kx, kp = jax.random.split(key)
    t = jax.random.normal(kx, (B, S, E), jnp.float32)
    # each row has exactly 2 tags not in {0, -1}, as the module asserts
    labels = jnp.array([[0, 2, 0, 0, 3, 0, -1, -1],
                        [0, 0, 1, 0, 0, 4, 0, 0]], dtype=jnp.int32)
    params = init_params(kp)
    prep = prepare_params(params)

    logits, single_labels = network_forward_jit(t, labels, prep)
    jax.block_until_ready((logits, single_labels))

    ref = network_forward_ref(t, labels, params)
    assert logits.shape == (B, NCLS)
    assert single_labels.shape == (B,)
    assert jnp.allclose(logits, ref, atol=1e-3, rtol=1e-3)
    print("KERNEL_OK")
</pallas_src>

<mosaic_0001>
module attributes {stable_mosaic.version = 11 : i64} {
  func.func @_network_kernel(%arg0: memref<64x64xf32, #tpu.memory_space<vmem>>, %arg1: memref<64x256xf32, #tpu.memory_space<vmem>>, %arg2: memref<1x256xf32, #tpu.memory_space<vmem>>, %arg3: memref<64x256xf32, #tpu.memory_space<vmem>>, %arg4: memref<8x8xf32, #tpu.memory_space<vmem>>, %arg5: memref<8x8xf32, #tpu.memory_space<vmem>>, %arg6: memref<128x128xf32, #tpu.memory_space<vmem>>, %arg7: memref<1x128xf32, #tpu.memory_space<vmem>>, %arg8: memref<128x128xf32, #tpu.memory_space<vmem>>, %arg9: memref<1x128xf32, #tpu.memory_space<vmem>>, %arg10: memref<8x128xf32, #tpu.memory_space<vmem>>) attributes {dimension_semantics = [], scalar_prefetch = 0 : i64, scratch_operands = 0 : i64, tpu.core_type = #tpu.core_type<tc>} {
    %c0 = arith.constant 0 : index
    %c0_0 = arith.constant 0 : index
    %0 = vector.load %arg0[%c0, %c0_0] : memref<64x64xf32, #tpu.memory_space<vmem>>, vector<64x64xf32>
    %c0_1 = arith.constant 0 : index
    %c0_2 = arith.constant 0 : index
    %1 = vector.load %arg1[%c0_1, %c0_2] : memref<64x256xf32, #tpu.memory_space<vmem>>, vector<64x256xf32>
    %cst = arith.constant dense<0.000000e+00> : vector<64x256xf32>
    %2 = tpu.matmul %0, %1, %cst {dimension_numbers = #tpu.dot_dimension_numbers<[1], [0], [0], [1], [0, 0, 1, 1], [], []>} : vector<64x64xf32>, vector<64x256xf32>, vector<64x256xf32> -> vector<64x256xf32>
    %c0_3 = arith.constant 0 : index
    %c0_4 = arith.constant 0 : index
    %3 = vector.load %arg2[%c0_3, %c0_4] : memref<1x256xf32, #tpu.memory_space<vmem>>, vector<1x256xf32>
    %4 = vector.broadcast %3 : vector<1x256xf32> to vector<64x256xf32>
    %5 = arith.addf %2, %4 : vector<64x256xf32>
    %c0_5 = arith.constant 0 : index
    %c0_6 = arith.constant 0 : index
    %6 = vector.load %arg3[%c0_5, %c0_6] : memref<64x256xf32, #tpu.memory_space<vmem>>, vector<64x256xf32>
    %c0_7 = arith.constant 0 : index
    %c0_8 = arith.constant 0 : index
    %7 = vector.load %arg4[%c0_7, %c0_8] : memref<8x8xf32, #tpu.memory_space<vmem>>, vector<8x8xf32>
    %c0_9 = arith.constant 0 : index
    %c0_10 = arith.constant 0 : index
    %8 = vector.load %arg5[%c0_9, %c0_10] : memref<8x8xf32, #tpu.memory_space<vmem>>, vector<8x8xf32>
    %9 = tpu.iota {dimensions = array<i32: 1>} : vector<8x256xi32>
    %c128_i32 = arith.constant 128 : i32
    %10 = vector.broadcast %c128_i32 : i32 to vector<8x256xi32>
    %11 = arith.cmpi sge, %9, %10 : vector<8x256xi32>
    %c192_i32 = arith.constant 192 : i32
    %12 = vector.broadcast %c192_i32 : i32 to vector<8x256xi32>
    %13 = arith.cmpi slt, %9, %12 : vector<8x256xi32>
    %14 = arith.andi %11, %13 : vector<8x256xi1>
    %cst_11 = arith.constant 1.000000e+00 : f32
    %cst_12 = arith.constant 5.000000e-01 : f32
    %15 = vector.broadcast %cst_11 : f32 to vector<8x256xf32>
    %16 = vector.broadcast %cst_12 : f32 to vector<8x256xf32>
    %17 = arith.select %14, %15, %16 : vector<8x256xi1>, vector<8x256xf32>
    %cst_13 = arith.constant 0.000000e+00 : f32
    %18 = vector.broadcast %cst_13 : f32 to vector<8x64xf32>
    %cst_14 = arith.constant 0.000000e+00 : f32
    %19 = vector.broadcast %cst_14 : f32 to vector<8x64xf32>
    %cst_15 = arith.constant 0.000000e+00 : f32
    %20 = vector.broadcast %cst_15 : f32 to vector<8x32xf32>
    %cst_16 = arith.constant 0.000000e+00 : f32
    %21 = vector.broadcast %cst_16 : f32 to vector<8x32xf32>
    %cst_17 = arith.constant 0.000000e+00 : f32
    %22 = vector.broadcast %cst_17 : f32 to vector<8x32xf32>
    %cst_18 = arith.constant 0.000000e+00 : f32
    %23 = vector.broadcast %cst_18 : f32 to vector<8x32xf32>
    %cst_19 = arith.constant dense<0.000000e+00> : vector<8x256xf32>
    %24 = tpu.matmul %18, %6, %cst_19 {dimension_numbers = #tpu.dot_dimension_numbers<[1], [0], [0], [1], [0, 0, 1, 1], [], []>} : vector<8x64xf32>, vector<64x256xf32>, vector<8x256xf32> -> vector<8x256xf32>
    %25 = vector.extract_strided_slice %5 {offsets = [0, 0], sizes = [8, 256], strides = [1, 1]} : vector<64x256xf32> to vector<8x256xf32>
    %26 = arith.addf %24, %25 : vector<8x256xf32>
    %27 = arith.mulf %26, %17 : vector<8x256xf32>
    %28 = math.tanh %27 : vector<8x256xf32>
    %cst_20 = arith.constant 5.000000e-01 : f32
    %29 = vector.broadcast %cst_20 : f32 to vector<8x256xf32>
    %30 = arith.mulf %29, %28 : vector<8x256xf32>
    %cst_21 = arith.constant 5.000000e-01 : f32
    %31 = vector.broadcast %cst_21 : f32 to vector<8x256xf32>
    %32 = arith.addf %30, %31 : vector<8x256xf32>
    %33 = arith.select %14, %28, %32 : vector<8x256xi1>, vector<8x256xf32>
    %34 = vector.extract_strided_slice %33 {offsets = [0, 0], sizes = [8, 64], strides = [1, 1]} : vector<8x256xf32> to vector<8x64xf32>
    %35 = vector.extract_strided_slice %33 {offsets = [0, 64], sizes = [8, 64], strides = [1, 1]} : vector<8x256xf32> to vector<8x64xf32>
    %36 = vector.extract_strided_slice %33 {offsets = [0, 128], sizes = [8, 64], strides = [1, 1]} : vector<8x256xf32> to vector<8x64xf32>
    %37 = vector.extract_strided_slice %33 {offsets = [0, 192], sizes = [8, 64], strides = [1, 1]} : vector<8x256xf32> to vector<8x64xf32>
    %38 = arith.mulf %35, %19 : vector<8x64xf32>
    %39 = arith.mulf %34, %36 : vector<8x64xf32>
    %40 = arith.addf %38, %39 : vector<8x64xf32>
    %41 = math.tanh %40 : vector<8x64xf32>
    %42 = arith.mulf %37, %41 : vector<8x64xf32>
    %43 = vector.extract_strided_slice %42 {offsets = [0, 0], sizes = [8, 32], strides = [1, 1]} : vector<8x64xf32> to vector<8x32xf32>
    %44 = vector.extract_strided_slice %42 {offsets = [0, 32], sizes = [8, 32], strides = [1, 1]} : vector<8x64xf32> to vector<8x32xf32>
    %45 = vector.extract_strided_slice %7 {offsets = [0, 0], sizes = [8, 1], strides = [1, 1]} : vector<8x8xf32> to vector<8x1xf32>
    %46 = vector.broadcast %45 : vector<8x1xf32> to vector<8x32xf32>
    %47 = arith.mulf %46, %43 : vector<8x32xf32>
    %48 = arith.addf %20, %47 : vector<8x32xf32>
    %49 = vector.extract_strided_slice %7 {offsets = [0, 7], sizes = [8, 1], strides = [1, 1]} : vector<8x8xf32> to vector<8x1xf32>
    %50 = vector.broadcast %49 : vector<8x1xf32> to vector<8x32xf32>
    %51 = arith.mulf %50, %44 : vector<8x32xf32>
    %52 = arith.addf %21, %51 : vector<8x32xf32>
    %53 = vector.extract_strided_slice %8 {offsets = [0, 0], sizes = [8, 1], strides = [1, 1]} : vector<8x8xf32> to vector<8x1xf32>
    %54 = vector.broadcast %53 : vector<8x1xf32> to vector<8x32xf32>
    %55 = arith.mulf %54, %43 : vector<8x32xf32>
    %56 = arith.addf %22, %55 : vector<8x32xf32>
    %57 = vector.extract_strided_slice %8 {offsets = [0, 7], sizes = [8, 1], strides = [1, 1]} : vector<8x8xf32> to vector<8x1xf32>
    %58 = vector.broadcast %57 : vector<8x1xf32> to vector<8x32xf32>
    %59 = arith.mulf %58, %44 : vector<8x32xf32>
    %60 = arith.addf %23, %59 : vector<8x32xf32>
    %cst_22 = arith.constant dense<0.000000e+00> : vector<8x256xf32>
    %61 = tpu.matmul %42, %6, %cst_22 {dimension_numbers = #tpu.dot_dimension_numbers<[1], [0], [0], [1], [0, 0, 1, 1], [], []>} : vector<8x64xf32>, vector<64x256xf32>, vector<8x256xf32> -> vector<8x256xf32>
    %62 = vector.extract_strided_slice %5 {offsets = [8, 0], sizes = [8, 256], strides = [1, 1]} : vector<64x256xf32> to vector<8x256xf32>
    %63 = arith.addf %61, %62 : vector<8x256xf32>
    %64 = arith.mulf %63, %17 : vector<8x256xf32>
    %65 = math.tanh %64 : vector<8x256xf32>
    %cst_23 = arith.constant 5.000000e-01 : f32
    %66 = vector.broadcast %cst_23 : f32 to vector<8x256xf32>
    %67 = arith.mulf %66, %65 : vector<8x256xf32>
    %cst_24 = arith.constant 5.000000e-01 : f32
    %68 = vector.broadcast %cst_24 : f32 to vector<8x256xf32>
    %69 = arith.addf %67, %68 : vector<8x256xf32>
    %70 = arith.select %14, %65, %69 : vector<8x256xi1>, vector<8x256xf32>
    %71 = vector.extract_strided_slice %70 {offsets = [0, 0], sizes = [8, 64], strides = [1, 1]} : vector<8x256xf32> to vector<8x64xf32>
    %72 = vector.extract_strided_slice %70 {offsets = [0, 64], sizes = [8, 64], strides = [1, 1]} : vector<8x256xf32> to vector<8x64xf32>
    %73 = vector.extract_strided_slice %70 {offsets = [0, 128], sizes = [8, 64], strides = [1, 1]} : vector<8x256xf32> to vector<8x64xf32>
    %74 = vector.extract_strided_slice %70 {offsets = [0, 192], sizes = [8, 64], strides = [1, 1]} : vector<8x256xf32> to vector<8x64xf32>
    %75 = arith.mulf %72, %40 : vector<8x64xf32>
    %76 = arith.mulf %71, %73 : vector<8x64xf32>
    %77 = arith.addf %75, %76 : vector<8x64xf32>
    %78 = math.tanh %77 : vector<8x64xf32>
    %79 = arith.mulf %74, %78 : vector<8x64xf32>
    %80 = vector.extract_strided_slice %79 {offsets = [0, 0], sizes = [8, 32], strides = [1, 1]} : vector<8x64xf32> to vector<8x32xf32>
    %81 = vector.extract_strided_slice %79 {offsets = [0, 32], sizes = [8, 32], strides = [1, 1]} : vector<8x64xf32> to vector<8x32xf32>
    %82 = vector.extract_strided_slice %7 {offsets = [0, 1], sizes = [8, 1], strides = [1, 1]} : vector<8x8xf32> to vector<8x1xf32>
    %83 = vector.broadcast %82 : vector<8x1xf32> to vector<8x32xf32>
    %84 = arith.mulf %83, %80 : vector<8x32xf32>
    %85 = arith.addf %48, %84 : vector<8x32xf32>
    %86 = vector.extract_strided_slice %7 {offsets = [0, 6], sizes = [8, 1], strides = [1, 1]} : vector<8x8xf32> to vector<8x1xf32>
    %87 = vector.broadcast %86 : vector<8x1xf32> to vector<8x32xf32>
    %88 = arith.mulf %87, %81 : vector<8x32xf32>
    %89 = arith.addf %52, %88 : vector<8x32xf32>
    %90 = vector.extract_strided_slice %8 {offsets = [0, 1], sizes = [8, 1], strides = [1, 1]} : vector<8x8xf32> to vector<8x1xf32>
    %91 = vector.broadcast %90 : vector<8x1xf32> to vector<8x32xf32>
    %92 = arith.mulf %91, %80 : vector<8x32xf32>
    %93 = arith.addf %56, %92 : vector<8x32xf32>
    %94 = vector.extract_strided_slice %8 {offsets = [0, 6], sizes = [8, 1], strides = [1, 1]} : vector<8x8xf32> to vector<8x1xf32>
    %95 = vector.broadcast %94 : vector<8x1xf32> to vector<8x32xf32>
    %96 = arith.mulf %95, %81 : vector<8x32xf32>
    %97 = arith.addf %60, %96 : vector<8x32xf32>
    %cst_25 = arith.constant dense<0.000000e+00> : vector<8x256xf32>
    %98 = tpu.matmul %79, %6, %cst_25 {dimension_numbers = #tpu.dot_dimension_numbers<[1], [0], [0], [1], [0, 0, 1, 1], [], []>} : vector<8x64xf32>, vector<64x256xf32>, vector<8x256xf32> -> vector<8x256xf32>
    %99 = vector.extract_strided_slice %5 {offsets = [16, 0], sizes = [8, 256], strides = [1, 1]} : vector<64x256xf32> to vector<8x256xf32>
    %100 = arith.addf %98, %99 : vector<8x256xf32>
    %101 = arith.mulf %100, %17 : vector<8x256xf32>
    %102 = math.tanh %101 : vector<8x256xf32>
    %cst_26 = arith.constant 5.000000e-01 : f32
    %103 = vector.broadcast %cst_26 : f32 to vector<8x256xf32>
    %104 = arith.mulf %103, %102 : vector<8x256xf32>
    %cst_27 = arith.constant 5.000000e-01 : f32
    %105 = vector.broadcast %cst_27 : f32 to vector<8x256xf32>
    %106 = arith.addf %104, %105 : vector<8x256xf32>
    %107 = arith.select %14, %102, %106 : vector<8x256xi1>, vector<8x256xf32>
    %108 = vector.extract_strided_slice %107 {offsets = [0, 0], sizes = [8, 64], strides = [1, 1]} : vector<8x256xf32> to vector<8x64xf32>
    %109 = vector.extract_strided_slice %107 {offsets = [0, 64], sizes = [8, 64], strides = [1, 1]} : vector<8x256xf32> to vector<8x64xf32>
    %110 = vector.extract_strided_slice %107 {offsets = [0, 128], sizes = [8, 64], strides = [1, 1]} : vector<8x256xf32> to vector<8x64xf32>
    %111 = vector.extract_strided_slice %107 {offsets = [0, 192], sizes = [8, 64], strides = [1, 1]} : vector<8x256xf32> to vector<8x64xf32>
    %112 = arith.mulf %109, %77 : vector<8x64xf32>
    %113 = arith.mulf %108, %110 : vector<8x64xf32>
    %114 = arith.addf %112, %113 : vector<8x64xf32>
    %115 = math.tanh %114 : vector<8x64xf32>
    %116 = arith.mulf %111, %115 : vector<8x64xf32>
    %117 = vector.extract_strided_slice %116 {offsets = [0, 0], sizes = [8, 32], strides = [1, 1]} : vector<8x64xf32> to vector<8x32xf32>
    %118 = vector.extract_strided_slice %116 {offsets = [0, 32], sizes = [8, 32], strides = [1, 1]} : vector<8x64xf32> to vector<8x32xf32>
    %119 = vector.extract_strided_slice %7 {offsets = [0, 2], sizes = [8, 1], strides = [1, 1]} : vector<8x8xf32> to vector<8x1xf32>
    %120 = vector.broadcast %119 : vector<8x1xf32> to vector<8x32xf32>
    %121 = arith.mulf %120, %117 : vector<8x32xf32>
    %122 = arith.addf %85, %121 : vector<8x32xf32>
    %123 = vector.extract_strided_slice %7 {offsets = [0, 5], sizes = [8, 1], strides = [1, 1]} : vector<8x8xf32> to vector<8x1xf32>
    %124 = vector.broadcast %123 : vector<8x1xf32> to vector<8x32xf32>
    %125 = arith.mulf %124, %118 : vector<8x32xf32>
    %126 = arith.addf %89, %125 : vector<8x32xf32>
    %127 = vector.extract_strided_slice %8 {offsets = [0, 2], sizes = [8, 1], strides = [1, 1]} : vector<8x8xf32> to vector<8x1xf32>
    %128 = vector.broadcast %127 : vector<8x1xf32> to vector<8x32xf32>
    %129 = arith.mulf %128, %117 : vector<8x32xf32>
    %130 = arith.addf %93, %129 : vector<8x32xf32>
    %131 = vector.extract_strided_slice %8 {offsets = [0, 5], sizes = [8, 1], strides = [1, 1]} : vector<8x8xf32> to vector<8x1xf32>
    %132 = vector.broadcast %131 : vector<8x1xf32> to vector<8x32xf32>
    %133 = arith.mulf %132, %118 : vector<8x32xf32>
    %134 = arith.addf %97, %133 : vector<8x32xf32>
    %cst_28 = arith.constant dense<0.000000e+00> : vector<8x256xf32>
    %135 = tpu.matmul %116, %6, %cst_28 {dimension_numbers = #tpu.dot_dimension_numbers<[1], [0], [0], [1], [0, 0, 1, 1], [], []>} : vector<8x64xf32>, vector<64x256xf32>, vector<8x256xf32> -> vector<8x256xf32>
    %136 = vector.extract_strided_slice %5 {offsets = [24, 0], sizes = [8, 256], strides = [1, 1]} : vector<64x256xf32> to vector<8x256xf32>
    %137 = arith.addf %135, %136 : vector<8x256xf32>
    %138 = arith.mulf %137, %17 : vector<8x256xf32>
    %139 = math.tanh %138 : vector<8x256xf32>
    %cst_29 = arith.constant 5.000000e-01 : f32
    %140 = vector.broadcast %cst_29 : f32 to vector<8x256xf32>
    %141 = arith.mulf %140, %139 : vector<8x256xf32>
    %cst_30 = arith.constant 5.000000e-01 : f32
    %142 = vector.broadcast %cst_30 : f32 to vector<8x256xf32>
    %143 = arith.addf %141, %142 : vector<8x256xf32>
    %144 = arith.select %14, %139, %143 : vector<8x256xi1>, vector<8x256xf32>
    %145 = vector.extract_strided_slice %144 {offsets = [0, 0], sizes = [8, 64], strides = [1, 1]} : vector<8x256xf32> to vector<8x64xf32>
    %146 = vector.extract_strided_slice %144 {offsets = [0, 64], sizes = [8, 64], strides = [1, 1]} : vector<8x256xf32> to vector<8x64xf32>
    %147 = vector.extract_strided_slice %144 {offsets = [0, 128], sizes = [8, 64], strides = [1, 1]} : vector<8x256xf32> to vector<8x64xf32>
    %148 = vector.extract_strided_slice %144 {offsets = [0, 192], sizes = [8, 64], strides = [1, 1]} : vector<8x256xf32> to vector<8x64xf32>
    %149 = arith.mulf %146, %114 : vector<8x64xf32>
    %150 = arith.mulf %145, %147 : vector<8x64xf32>
    %151 = arith.addf %149, %150 : vector<8x64xf32>
    %152 = math.tanh %151 : vector<8x64xf32>
    %153 = arith.mulf %148, %152 : vector<8x64xf32>
    %154 = vector.extract_strided_slice %153 {offsets = [0, 0], sizes = [8, 32], strides = [1, 1]} : vector<8x64xf32> to vector<8x32xf32>
    %155 = vector.extract_strided_slice %153 {offsets = [0, 32], sizes = [8, 32], strides = [1, 1]} : vector<8x64xf32> to vector<8x32xf32>
    %156 = vector.extract_strided_slice %7 {offsets = [0, 3], sizes = [8, 1], strides = [1, 1]} : vector<8x8xf32> to vector<8x1xf32>
    %157 = vector.broadcast %156 : vector<8x1xf32> to vector<8x32xf32>
    %158 = arith.mulf %157, %154 : vector<8x32xf32>
    %159 = arith.addf %122, %158 : vector<8x32xf32>
    %160 = vector.extract_strided_slice %7 {offsets = [0, 4], sizes = [8, 1], strides = [1, 1]} : vector<8x8xf32> to vector<8x1xf32>
    %161 = vector.broadcast %160 : vector<8x1xf32> to vector<8x32xf32>
    %162 = arith.mulf %161, %155 : vector<8x32xf32>
    %163 = arith.addf %126, %162 : vector<8x32xf32>
    %164 = vector.extract_strided_slice %8 {offsets = [0, 3], sizes = [8, 1], strides = [1, 1]} : vector<8x8xf32> to vector<8x1xf32>
    %165 = vector.broadcast %164 : vector<8x1xf32> to vector<8x32xf32>
    %166 = arith.mulf %165, %154 : vector<8x32xf32>
    %167 = arith.addf %130, %166 : vector<8x32xf32>
    %168 = vector.extract_strided_slice %8 {offsets = [0, 4], sizes = [8, 1], strides = [1, 1]} : vector<8x8xf32> to vector<8x1xf32>
    %169 = vector.broadcast %168 : vector<8x1xf32> to vector<8x32xf32>
    %170 = arith.mulf %169, %155 : vector<8x32xf32>
    %171 = arith.addf %134, %170 : vector<8x32xf32>
    %cst_31 = arith.constant dense<0.000000e+00> : vector<8x256xf32>
    %172 = tpu.matmul %153, %6, %cst_31 {dimension_numbers = #tpu.dot_dimension_numbers<[1], [0], [0], [1], [0, 0, 1, 1], [], []>} : vector<8x64xf32>, vector<64x256xf32>, vector<8x256xf32> -> vector<8x256xf32>
    %173 = vector.extract_strided_slice %5 {offsets = [32, 0], sizes = [8, 256], strides = [1, 1]} : vector<64x256xf32> to vector<8x256xf32>
    %174 = arith.addf %172, %173 : vector<8x256xf32>
    %175 = arith.mulf %174, %17 : vector<8x256xf32>
    %176 = math.tanh %175 : vector<8x256xf32>
    %cst_32 = arith.constant 5.000000e-01 : f32
    %177 = vector.broadcast %cst_32 : f32 to vector<8x256xf32>
    %178 = arith.mulf %177, %176 : vector<8x256xf32>
    %cst_33 = arith.constant 5.000000e-01 : f32
    %179 = vector.broadcast %cst_33 : f32 to vector<8x256xf32>
    %180 = arith.addf %178, %179 : vector<8x256xf32>
    %181 = arith.select %14, %176, %180 : vector<8x256xi1>, vector<8x256xf32>
    %182 = vector.extract_strided_slice %181 {offsets = [0, 0], sizes = [8, 64], strides = [1, 1]} : vector<8x256xf32> to vector<8x64xf32>
    %183 = vector.extract_strided_slice %181 {offsets = [0, 64], sizes = [8, 64], strides = [1, 1]} : vector<8x256xf32> to vector<8x64xf32>
    %184 = vector.extract_strided_slice %181 {offsets = [0, 128], sizes = [8, 64], strides = [1, 1]} : vector<8x256xf32> to vector<8x64xf32>
    %185 = vector.extract_strided_slice %181 {offsets = [0, 192], sizes = [8, 64], strides = [1, 1]} : vector<8x256xf32> to vector<8x64xf32>
    %186 = arith.mulf %183, %151 : vector<8x64xf32>
    %187 = arith.mulf %182, %184 : vector<8x64xf32>
    %188 = arith.addf %186, %187 : vector<8x64xf32>
    %189 = math.tanh %188 : vector<8x64xf32>
    %190 = arith.mulf %185, %189 : vector<8x64xf32>
    %191 = vector.extract_strided_slice %190 {offsets = [0, 0], sizes = [8, 32], strides = [1, 1]} : vector<8x64xf32> to vector<8x32xf32>
    %192 = vector.extract_strided_slice %190 {offsets = [0, 32], sizes = [8, 32], strides = [1, 1]} : vector<8x64xf32> to vector<8x32xf32>
    %193 = vector.extract_strided_slice %7 {offsets = [0, 4], sizes = [8, 1], strides = [1, 1]} : vector<8x8xf32> to vector<8x1xf32>
    %194 = vector.broadcast %193 : vector<8x1xf32> to vector<8x32xf32>
    %195 = arith.mulf %194, %191 : vector<8x32xf32>
    %196 = arith.addf %159, %195 : vector<8x32xf32>
    %197 = vector.extract_strided_slice %7 {offsets = [0, 3], sizes = [8, 1], strides = [1, 1]} : vector<8x8xf32> to vector<8x1xf32>
    %198 = vector.broadcast %197 : vector<8x1xf32> to vector<8x32xf32>
    %199 = arith.mulf %198, %192 : vector<8x32xf32>
    %200 = arith.addf %163, %199 : vector<8x32xf32>
    %201 = vector.extract_strided_slice %8 {offsets = [0, 4], sizes = [8, 1], strides = [1, 1]} : vector<8x8xf32> to vector<8x1xf32>
    %202 = vector.broadcast %201 : vector<8x1xf32> to vector<8x32xf32>
    %203 = arith.mulf %202, %191 : vector<8x32xf32>
    %204 = arith.addf %167, %203 : vector<8x32xf32>
    %205 = vector.extract_strided_slice %8 {offsets = [0, 3], sizes = [8, 1], strides = [1, 1]} : vector<8x8xf32> to vector<8x1xf32>
    %206 = vector.broadcast %205 : vector<8x1xf32> to vector<8x32xf32>
    %207 = arith.mulf %206, %192 : vector<8x32xf32>
    %208 = arith.addf %171, %207 : vector<8x32xf32>
    %cst_34 = arith.constant dense<0.000000e+00> : vector<8x256xf32>
    %209 = tpu.matmul %190, %6, %cst_34 {dimension_numbers = #tpu.dot_dimension_numbers<[1], [0], [0], [1], [0, 0, 1, 1], [], []>} : vector<8x64xf32>, vector<64x256xf32>, vector<8x256xf32> -> vector<8x256xf32>
    %210 = vector.extract_strided_slice %5 {offsets = [40, 0], sizes = [8, 256], strides = [1, 1]} : vector<64x256xf32> to vector<8x256xf32>
    %211 = arith.addf %209, %210 : vector<8x256xf32>
    %212 = arith.mulf %211, %17 : vector<8x256xf32>
    %213 = math.tanh %212 : vector<8x256xf32>
    %cst_35 = arith.constant 5.000000e-01 : f32
    %214 = vector.broadcast %cst_35 : f32 to vector<8x256xf32>
    %215 = arith.mulf %214, %213 : vector<8x256xf32>
    %cst_36 = arith.constant 5.000000e-01 : f32
    %216 = vector.broadcast %cst_36 : f32 to vector<8x256xf32>
    %217 = arith.addf %215, %216 : vector<8x256xf32>
    %218 = arith.select %14, %213, %217 : vector<8x256xi1>, vector<8x256xf32>
    %219 = vector.extract_strided_slice %218 {offsets = [0, 0], sizes = [8, 64], strides = [1, 1]} : vector<8x256xf32> to vector<8x64xf32>
    %220 = vector.extract_strided_slice %218 {offsets = [0, 64], sizes = [8, 64], strides = [1, 1]} : vector<8x256xf32> to vector<8x64xf32>
    %221 = vector.extract_strided_slice %218 {offsets = [0, 128], sizes = [8, 64], strides = [1, 1]} : vector<8x256xf32> to vector<8x64xf32>
    %222 = vector.extract_strided_slice %218 {offsets = [0, 192], sizes = [8, 64], strides = [1, 1]} : vector<8x256xf32> to vector<8x64xf32>
    %223 = arith.mulf %220, %188 : vector<8x64xf32>
    %224 = arith.mulf %219, %221 : vector<8x64xf32>
    %225 = arith.addf %223, %224 : vector<8x64xf32>
    %226 = math.tanh %225 : vector<8x64xf32>
    %227 = arith.mulf %222, %226 : vector<8x64xf32>
    %228 = vector.extract_strided_slice %227 {offsets = [0, 0], sizes = [8, 32], strides = [1, 1]} : vector<8x64xf32> to vector<8x32xf32>
    %229 = vector.extract_strided_slice %227 {offsets = [0, 32], sizes = [8, 32], strides = [1, 1]} : vector<8x64xf32> to vector<8x32xf32>
    %230 = vector.extract_strided_slice %7 {offsets = [0, 5], sizes = [8, 1], strides = [1, 1]} : vector<8x8xf32> to vector<8x1xf32>
    %231 = vector.broadcast %230 : vector<8x1xf32> to vector<8x32xf32>
    %232 = arith.mulf %231, %228 : vector<8x32xf32>
    %233 = arith.addf %196, %232 : vector<8x32xf32>
    %234 = vector.extract_strided_slice %7 {offsets = [0, 2], sizes = [8, 1], strides = [1, 1]} : vector<8x8xf32> to vector<8x1xf32>
    %235 = vector.broadcast %234 : vector<8x1xf32> to vector<8x32xf32>
    %236 = arith.mulf %235, %229 : vector<8x32xf32>
    %237 = arith.addf %200, %236 : vector<8x32xf32>
    %238 = vector.extract_strided_slice %8 {offsets = [0, 5], sizes = [8, 1], strides = [1, 1]} : vector<8x8xf32> to vector<8x1xf32>
    %239 = vector.broadcast %238 : vector<8x1xf32> to vector<8x32xf32>
    %240 = arith.mulf %239, %228 : vector<8x32xf32>
    %241 = arith.addf %204, %240 : vector<8x32xf32>
    %242 = vector.extract_strided_slice %8 {offsets = [0, 2], sizes = [8, 1], strides = [1, 1]} : vector<8x8xf32> to vector<8x1xf32>
    %243 = vector.broadcast %242 : vector<8x1xf32> to vector<8x32xf32>
    %244 = arith.mulf %243, %229 : vector<8x32xf32>
    %245 = arith.addf %208, %244 : vector<8x32xf32>
    %cst_37 = arith.constant dense<0.000000e+00> : vector<8x256xf32>
    %246 = tpu.matmul %227, %6, %cst_37 {dimension_numbers = #tpu.dot_dimension_numbers<[1], [0], [0], [1], [0, 0, 1, 1], [], []>} : vector<8x64xf32>, vector<64x256xf32>, vector<8x256xf32> -> vector<8x256xf32>
    %247 = vector.extract_strided_slice %5 {offsets = [48, 0], sizes = [8, 256], strides = [1, 1]} : vector<64x256xf32> to vector<8x256xf32>
    %248 = arith.addf %246, %247 : vector<8x256xf32>
    %249 = arith.mulf %248, %17 : vector<8x256xf32>
    %250 = math.tanh %249 : vector<8x256xf32>
    %cst_38 = arith.constant 5.000000e-01 : f32
    %251 = vector.broadcast %cst_38 : f32 to vector<8x256xf32>
    %252 = arith.mulf %251, %250 : vector<8x256xf32>
    %cst_39 = arith.constant 5.000000e-01 : f32
    %253 = vector.broadcast %cst_39 : f32 to vector<8x256xf32>
    %254 = arith.addf %252, %253 : vector<8x256xf32>
    %255 = arith.select %14, %250, %254 : vector<8x256xi1>, vector<8x256xf32>
    %256 = vector.extract_strided_slice %255 {offsets = [0, 0], sizes = [8, 64], strides = [1, 1]} : vector<8x256xf32> to vector<8x64xf32>
    %257 = vector.extract_strided_slice %255 {offsets = [0, 64], sizes = [8, 64], strides = [1, 1]} : vector<8x256xf32> to vector<8x64xf32>
    %258 = vector.extract_strided_slice %255 {offsets = [0, 128], sizes = [8, 64], strides = [1, 1]} : vector<8x256xf32> to vector<8x64xf32>
    %259 = vector.extract_strided_slice %255 {offsets = [0, 192], sizes = [8, 64], strides = [1, 1]} : vector<8x256xf32> to vector<8x64xf32>
    %260 = arith.mulf %257, %225 : vector<8x64xf32>
    %261 = arith.mulf %256, %258 : vector<8x64xf32>
    %262 = arith.addf %260, %261 : vector<8x64xf32>
    %263 = math.tanh %262 : vector<8x64xf32>
    %264 = arith.mulf %259, %263 : vector<8x64xf32>
    %265 = vector.extract_strided_slice %264 {offsets = [0, 0], sizes = [8, 32], strides = [1, 1]} : vector<8x64xf32> to vector<8x32xf32>
    %266 = vector.extract_strided_slice %264 {offsets = [0, 32], sizes = [8, 32], strides = [1, 1]} : vector<8x64xf32> to vector<8x32xf32>
    %267 = vector.extract_strided_slice %7 {offsets = [0, 6], sizes = [8, 1], strides = [1, 1]} : vector<8x8xf32> to vector<8x1xf32>
    %268 = vector.broadcast %267 : vector<8x1xf32> to vector<8x32xf32>
    %269 = arith.mulf %268, %265 : vector<8x32xf32>
    %270 = arith.addf %233, %269 : vector<8x32xf32>
    %271 = vector.extract_strided_slice %7 {offsets = [0, 1], sizes = [8, 1], strides = [1, 1]} : vector<8x8xf32> to vector<8x1xf32>
    %272 = vector.broadcast %271 : vector<8x1xf32> to vector<8x32xf32>
    %273 = arith.mulf %272, %266 : vector<8x32xf32>
    %274 = arith.addf %237, %273 : vector<8x32xf32>
    %275 = vector.extract_strided_slice %8 {offsets = [0, 6], sizes = [8, 1], strides = [1, 1]} : vector<8x8xf32> to vector<8x1xf32>
    %276 = vector.broadcast %275 : vector<8x1xf32> to vector<8x32xf32>
    %277 = arith.mulf %276, %265 : vector<8x32xf32>
    %278 = arith.addf %241, %277 : vector<8x32xf32>
    %279 = vector.extract_strided_slice %8 {offsets = [0, 1], sizes = [8, 1], strides = [1, 1]} : vector<8x8xf32> to vector<8x1xf32>
    %280 = vector.broadcast %279 : vector<8x1xf32> to vector<8x32xf32>
    %281 = arith.mulf %280, %266 : vector<8x32xf32>
    %282 = arith.addf %245, %281 : vector<8x32xf32>
    %cst_40 = arith.constant dense<0.000000e+00> : vector<8x256xf32>
    %283 = tpu.matmul %264, %6, %cst_40 {dimension_numbers = #tpu.dot_dimension_numbers<[1], [0], [0], [1], [0, 0, 1, 1], [], []>} : vector<8x64xf32>, vector<64x256xf32>, vector<8x256xf32> -> vector<8x256xf32>
    %284 = vector.extract_strided_slice %5 {offsets = [56, 0], sizes = [8, 256], strides = [1, 1]} : vector<64x256xf32> to vector<8x256xf32>
    %285 = arith.addf %283, %284 : vector<8x256xf32>
    %286 = arith.mulf %285, %17 : vector<8x256xf32>
    %287 = math.tanh %286 : vector<8x256xf32>
    %cst_41 = arith.constant 5.000000e-01 : f32
    %288 = vector.broadcast %cst_41 : f32 to vector<8x256xf32>
    %289 = arith.mulf %288, %287 : vector<8x256xf32>
    %cst_42 = arith.constant 5.000000e-01 : f32
    %290 = vector.broadcast %cst_42 : f32 to vector<8x256xf32>
    %291 = arith.addf %289, %290 : vector<8x256xf32>
    %292 = arith.select %14, %287, %291 : vector<8x256xi1>, vector<8x256xf32>
    %293 = vector.extract_strided_slice %292 {offsets = [0, 0], sizes = [8, 64], strides = [1, 1]} : vector<8x256xf32> to vector<8x64xf32>
    %294 = vector.extract_strided_slice %292 {offsets = [0, 64], sizes = [8, 64], strides = [1, 1]} : vector<8x256xf32> to vector<8x64xf32>
    %295 = vector.extract_strided_slice %292 {offsets = [0, 128], sizes = [8, 64], strides = [1, 1]} : vector<8x256xf32> to vector<8x64xf32>
    %296 = vector.extract_strided_slice %292 {offsets = [0, 192], sizes = [8, 64], strides = [1, 1]} : vector<8x256xf32> to vector<8x64xf32>
    %297 = arith.mulf %294, %262 : vector<8x64xf32>
    %298 = arith.mulf %293, %295 : vector<8x64xf32>
    %299 = arith.addf %297, %298 : vector<8x64xf32>
    %300 = math.tanh %299 : vector<8x64xf32>
    %301 = arith.mulf %296, %300 : vector<8x64xf32>
    %302 = vector.extract_strided_slice %301 {offsets = [0, 0], sizes = [8, 32], strides = [1, 1]} : vector<8x64xf32> to vector<8x32xf32>
    %303 = vector.extract_strided_slice %301 {offsets = [0, 32], sizes = [8, 32], strides = [1, 1]} : vector<8x64xf32> to vector<8x32xf32>
    %304 = vector.extract_strided_slice %7 {offsets = [0, 7], sizes = [8, 1], strides = [1, 1]} : vector<8x8xf32> to vector<8x1xf32>
    %305 = vector.broadcast %304 : vector<8x1xf32> to vector<8x32xf32>
    %306 = arith.mulf %305, %302 : vector<8x32xf32>
    %307 = arith.addf %270, %306 : vector<8x32xf32>
    %308 = vector.extract_strided_slice %7 {offsets = [0, 0], sizes = [8, 1], strides = [1, 1]} : vector<8x8xf32> to vector<8x1xf32>
    %309 = vector.broadcast %308 : vector<8x1xf32> to vector<8x32xf32>
    %310 = arith.mulf %309, %303 : vector<8x32xf32>
    %311 = arith.addf %274, %310 : vector<8x32xf32>
    %312 = vector.extract_strided_slice %8 {offsets = [0, 7], sizes = [8, 1], strides = [1, 1]} : vector<8x8xf32> to vector<8x1xf32>
    %313 = vector.broadcast %312 : vector<8x1xf32> to vector<8x32xf32>
    %314 = arith.mulf %313, %302 : vector<8x32xf32>
    %315 = arith.addf %278, %314 : vector<8x32xf32>
    %316 = vector.extract_strided_slice %8 {offsets = [0, 0], sizes = [8, 1], strides = [1, 1]} : vector<8x8xf32> to vector<8x1xf32>
    %317 = vector.broadcast %316 : vector<8x1xf32> to vector<8x32xf32>
    %318 = arith.mulf %317, %303 : vector<8x32xf32>
    %319 = arith.addf %282, %318 : vector<8x32xf32>
    %320 = tpu.concatenate %307, %311, %315, %319 in 1 : vector<8x32xf32>, vector<8x32xf32>, vector<8x32xf32>, vector<8x32xf32> -> vector<8x128xf32>
    %c0_43 = arith.constant 0 : index
    %c0_44 = arith.constant 0 : index
    %321 = vector.load %arg6[%c0_43, %c0_44] : memref<128x128xf32, #tpu.memory_space<vmem>>, vector<128x128xf32>
    %cst_45 = arith.constant dense<0.000000e+00> : vector<8x128xf32>
    %322 = tpu.matmul %320, %321, %cst_45 {dimension_numbers = #tpu.dot_dimension_numbers<[1], [0], [0], [1], [0, 0, 1, 1], [], []>} : vector<8x128xf32>, vector<128x128xf32>, vector<8x128xf32> -> vector<8x128xf32>
    %c0_46 = arith.constant 0 : index
    %c0_47 = arith.constant 0 : index
    %323 = vector.load %arg7[%c0_46, %c0_47] : memref<1x128xf32, #tpu.memory_space<vmem>>, vector<1x128xf32>
    %324 = vector.broadcast %323 : vector<1x128xf32> to vector<8x128xf32>
    %325 = arith.addf %322, %324 : vector<8x128xf32>
    %326 = math.tanh %325 : vector<8x128xf32>
    %c0_48 = arith.constant 0 : index
    %c0_49 = arith.constant 0 : index
    %327 = vector.load %arg8[%c0_48, %c0_49] : memref<128x128xf32, #tpu.memory_space<vmem>>, vector<128x128xf32>
    %cst_50 = arith.constant dense<0.000000e+00> : vector<8x128xf32>
    %328 = tpu.matmul %326, %327, %cst_50 {dimension_numbers = #tpu.dot_dimension_numbers<[1], [0], [0], [1], [0, 0, 1, 1], [], []>} : vector<8x128xf32>, vector<128x128xf32>, vector<8x128xf32> -> vector<8x128xf32>
    %c0_51 = arith.constant 0 : index
    %c0_52 = arith.constant 0 : index
    %329 = vector.load %arg9[%c0_51, %c0_52] : memref<1x128xf32, #tpu.memory_space<vmem>>, vector<1x128xf32>
    %330 = vector.broadcast %329 : vector<1x128xf32> to vector<8x128xf32>
    %331 = arith.addf %328, %330 : vector<8x128xf32>
    %c0_53 = arith.constant 0 : index
    %c0_54 = arith.constant 0 : index
    %332 = vector.load %arg10[%c0_53, %c0_54] : memref<8x128xf32, #tpu.memory_space<vmem>>, vector<8x128xf32>
    tpu.vector_store %arg10[%c0_53, %c0_54], %331 {strides = array<i32>} : memref<8x128xf32, #tpu.memory_space<vmem>>, vector<8x128xf32>,
    return
  }
}

</mosaic_0001>

<llo_original>
// kernel: network_forward.1
$region0: #{network_forward.1}
  #allocation0 [shape = 'u32[]', space=smem, size = 0x4, offset = 0x4, fixed_abs, tag = 'smem constant byte address 0x4 - core index']
  #allocation1 [shape = 'u32[72,128]{1,0:T(1,128)}', space=vmem, size = 0x9000, scoped, tag = 'internal scratch']
  %s0 = inlined_call_operand.vmem [shape: f32[64,64], index: 0, kind: input, shape index: {}]
  %s1 = inlined_call_operand.vmem [shape: f32[64,256], index: 1, kind: input, shape index: {}]
  %s2 = inlined_call_operand.vmem [shape: f32[1,256], index: 2, kind: input, shape index: {}]
  %s3 = inlined_call_operand.vmem [shape: f32[64,256], index: 3, kind: input, shape index: {}]
  %s4 = inlined_call_operand.vmem [shape: f32[8,8], index: 4, kind: input, shape index: {}]
  %s5 = inlined_call_operand.vmem [shape: f32[8,8], index: 5, kind: input, shape index: {}]
  %s6 = inlined_call_operand.vmem [shape: f32[128,128], index: 6, kind: input, shape index: {}]
  %s7 = inlined_call_operand.vmem [shape: f32[1,128], index: 7, kind: input, shape index: {}]
  %s8 = inlined_call_operand.vmem [shape: f32[128,128], index: 8, kind: input, shape index: {}]
  %s9 = inlined_call_operand.vmem [shape: f32[1,128], index: 9, kind: input, shape index: {}]
  %s10 = inlined_call_operand.vmem [shape: f32[8,128], index: 10, kind: output, shape index: {}]
  %s11 = sld [smem:[#allocation0]]
  $region50: #{network_forward.1} parent=0
    _
  %s13 = ssub.s32 1, %s11
  %s14 = scalar_select 0, %s13, %s11
  // Predicated region
  $region2: #{network_forward.1} parent=0 // pred_check
    _
  $region3: #{network_forward.1} parent=0 // pred_check_branch
    %16 = sbr.rel (0) target = $region5
  $region4: #{network_forward.1} parent=0 // pred_region
    _
  $region5: #{network_forward.1} parent=0 // pred_fallthru
    _
  // Predicated region
  $region6: #{network_forward.1} parent=0 // pred_check
    _
  $region7: #{network_forward.1} parent=0 // pred_check_branch
    %18 = sbr.rel (0) target = $region9
  $region8: #{network_forward.1} parent=0 // pred_region
    _
  $region9: #{network_forward.1} parent=0 // pred_fallthru
    _
  // Predicated region
  $region10: #{network_forward.1} parent=0 // pred_check
    _
  $region11: #{network_forward.1} parent=0 // pred_check_branch
    %20 = sbr.rel (0) target = $region13
  $region12: #{network_forward.1} parent=0 // pred_region
    _
  $region13: #{network_forward.1} parent=0 // pred_fallthru
    _
  // Predicated region
  $region14: #{network_forward.1} parent=0 // pred_check
    _
  $region15: #{network_forward.1} parent=0 // pred_check_branch
    %22 = sbr.rel (0) target = $region17
  $region16: #{network_forward.1} parent=0 // pred_region
    _
  $region17: #{network_forward.1} parent=0 // pred_fallthru
    _
  // Predicated region
  $region18: #{network_forward.1} parent=0 // pred_check
    _
  $region19: #{network_forward.1} parent=0 // pred_check_branch
    %24 = sbr.rel (0) target = $region21
  $region20: #{network_forward.1} parent=0 // pred_region
    _
  $region21: #{network_forward.1} parent=0 // pred_fallthru
    _
  // Predicated region
  $region22: #{network_forward.1} parent=0 // pred_check
    _
  $region23: #{network_forward.1} parent=0 // pred_check_branch
    %26 = sbr.rel (0) target = $region25
  $region24: #{network_forward.1} parent=0 // pred_region
    _
  $region25: #{network_forward.1} parent=0 // pred_fallthru
    _
  // Predicated region
  $region26: #{network_forward.1} parent=0 // pred_check
    _
  $region27: #{network_forward.1} parent=0 // pred_check_branch
    %28 = sbr.rel (0) target = $region29
  $region28: #{network_forward.1} parent=0 // pred_region
    _
  $region29: #{network_forward.1} parent=0 // pred_fallthru
    _
  // Predicated region
  $region30: #{network_forward.1} parent=0 // pred_check
    _
  $region31: #{network_forward.1} parent=0 // pred_check_branch
    %30 = sbr.rel (0) target = $region33
  $region32: #{network_forward.1} parent=0 // pred_region
    _
  $region33: #{network_forward.1} parent=0 // pred_fallthru
    _
  // Predicated region
  $region34: #{network_forward.1} parent=0 // pred_check
    _
  $region35: #{network_forward.1} parent=0 // pred_check_branch
    %32 = sbr.rel (0) target = $region37
  $region36: #{network_forward.1} parent=0 // pred_region
    _
  $region37: #{network_forward.1} parent=0 // pred_fallthru
    _
  // Predicated region
  $region38: #{network_forward.1} parent=0 // pred_check
    _
  $region39: #{network_forward.1} parent=0 // pred_check_branch
    %34 = sbr.rel (0) target = $region41
  $region40: #{network_forward.1} parent=0 // pred_region
    _
  $region41: #{network_forward.1} parent=0 // pred_fallthru
    _
  %v35 = vld [vmem:[%s0] sm:$0xff]
  %v36 = vld [vmem:[%s0 + $0x8] sm:$0xff]
  %v37 = vld [vmem:[%s0 + $0x10] sm:$0xff]
  %v38 = vld [vmem:[%s0 + $0x18] sm:$0xff]
  %v39 = vld [vmem:[%s0 + $0x20] sm:$0xff]
  %v40 = vld [vmem:[%s0 + $0x28] sm:$0xff]
  %v41 = vld [vmem:[%s0 + $0x30] sm:$0xff]
  %v42 = vld [vmem:[%s0 + $0x38] sm:$0xff]
  %v43 = vld [vmem:[%s1] sm:$0xff]
  %v44 = vld [vmem:[%s1 + $0x8] sm:$0xff]
  %v45 = vld [vmem:[%s1 + $0x10] sm:$0xff]
  %v46 = vld [vmem:[%s1 + $0x18] sm:$0xff]
  %v47 = vld [vmem:[%s1 + $0x20] sm:$0xff]
  %v48 = vld [vmem:[%s1 + $0x28] sm:$0xff]
  %v49 = vld [vmem:[%s1 + $0x30] sm:$0xff]
  %v50 = vld [vmem:[%s1 + $0x38] sm:$0xff]
  %v51 = vld [vmem:[%s1 + $0x40] sm:$0xff]
  %v52 = vld [vmem:[%s1 + $0x48] sm:$0xff]
  %v53 = vld [vmem:[%s1 + $0x50] sm:$0xff]
  %v54 = vld [vmem:[%s1 + $0x58] sm:$0xff]
  %v55 = vld [vmem:[%s1 + $0x60] sm:$0xff]
  %v56 = vld [vmem:[%s1 + $0x68] sm:$0xff]
  %v57 = vld [vmem:[%s1 + $0x70] sm:$0xff]
  %v58 = vld [vmem:[%s1 + $0x78] sm:$0xff]
  %v59 = vld [vmem:[%s2] sm:$0x3]
  %v61 = vperm.slane %v59, 0
  %v62 = vperm.slane %v59, 1
  %vm65 = vcmask 523264
  %v67 = vsel %vm65, %v35, 0
  %v70 = vsel %vm65, %v36, 0
  %v73 = vsel %vm65, %v37, 0
  %v76 = vsel %vm65, %v38, 0
  %v79 = vsel %vm65, %v39, 0
  %v82 = vsel %vm65, %v40, 0
  %v85 = vsel %vm65, %v41, 0
  %v88 = vsel %vm65, %v42, 0
  %90 = vmatpush.msra.mxu0 0.0
  %91 = vmatpush.msra.mxu0 0.0
  %92 = vmatpush.msra.mxu0 0.0
  %93 = vmatpush.msra.mxu0 0.0
  %94 = vmatpush.msra.mxu0 0.0
  %95 = vmatpush.msra.mxu0 0.0
  %96 = vmatpush.msra.mxu0 0.0
  %97 = vmatpush.msra.mxu0 0.0
  %98 = vmatpush.msra.mxu0 %v57
  %99 = vmatpush.msra.mxu0 %v55
  %100 = vmatpush.msra.mxu0 %v53
  %101 = vmatpush.msra.mxu0 %v51
  %102 = vmatpush.msra.mxu0 %v49
  %103 = vmatpush.msra.mxu0 %v47
  %104 = vmatpush.msra.mxu0 %v45
  %105 = vmatpush.msra.mxu0 %v43
  %106 = vmatmul.f32.gmra.mxu0 %v67
  %v107 = vpop.f32.mrf.mxu0
  %v108 = vadd.f32 %v61, %v107
  %109 = vmatmul.f32.gmra.mxu0 %v70
  %v110 = vpop.f32.mrf.mxu0
  %v111 = vadd.f32 %v61, %v110
  %112 = vmatmul.f32.gmra.mxu0 %v73
  %v113 = vpop.f32.mrf.mxu0
  %v114 = vadd.f32 %v61, %v113
  %115 = vmatmul.f32.gmra.mxu0 %v76
  %v116 = vpop.f32.mrf.mxu0
  %v117 = vadd.f32 %v61, %v116
  %118 = vmatmul.f32.gmra.mxu0 %v79
  %v119 = vpop.f32.mrf.mxu0
  %v120 = vadd.f32 %v61, %v119
  %121 = vmatmul.f32.gmra.mxu0 %v82
  %v122 = vpop.f32.mrf.mxu0
  %v123 = vadd.f32 %v61, %v122
  %124 = vmatmul.f32.gmra.mxu0 %v85
  %v125 = vpop.f32.mrf.mxu0
  %v126 = vadd.f32 %v61, %v125
  %127 = vmatmul.f32.gmra.mxu0 %v88
  %v128 = vpop.f32.mrf.mxu0
  %v129 = vadd.f32 %v61, %v128
  %130 = vdwg.mxu0
  %131 = vmatpush.msra.mxu0 0.0
  %132 = vmatpush.msra.mxu0 0.0
  %133 = vmatpush.msra.mxu0 0.0
  %134 = vmatpush.msra.mxu0 0.0
  %135 = vmatpush.msra.mxu0 0.0
  %136 = vmatpush.msra.mxu0 0.0
  %137 = vmatpush.msra.mxu0 0.0
  %138 = vmatpush.msra.mxu0 0.0
  %139 = vmatpush.msra.mxu0 %v58
  %140 = vmatpush.msra.mxu0 %v56
  %141 = vmatpush.msra.mxu0 %v54
  %142 = vmatpush.msra.mxu0 %v52
  %143 = vmatpush.msra.mxu0 %v50
  %144 = vmatpush.msra.mxu0 %v48
  %145 = vmatpush.msra.mxu0 %v46
  %146 = vmatpush.msra.mxu0 %v44
  %147 = vmatmul.f32.gmra.mxu0 %v67
  %v148 = vpop.f32.mrf.mxu0
  %v149 = vadd.f32 %v62, %v148
  %150 = vmatmul.f32.gmra.mxu0 %v70
  %v151 = vpop.f32.mrf.mxu0
  %v152 = vadd.f32 %v62, %v151
  %153 = vmatmul.f32.gmra.mxu0 %v73
  %v154 = vpop.f32.mrf.mxu0
  %v155 = vadd.f32 %v62, %v154
  %156 = vmatmul.f32.gmra.mxu0 %v76
  %v157 = vpop.f32.mrf.mxu0
  %v158 = vadd.f32 %v62, %v157
  %159 = vmatmul.f32.gmra.mxu0 %v79
  %v160 = vpop.f32.mrf.mxu0
  %v161 = vadd.f32 %v62, %v160
  %162 = vmatmul.f32.gmra.mxu0 %v82
  %v163 = vpop.f32.mrf.mxu0
  %v164 = vadd.f32 %v62, %v163
  %165 = vmatmul.f32.gmra.mxu0 %v85
  %v166 = vpop.f32.mrf.mxu0
  %v167 = vadd.f32 %v62, %v166
  %168 = vmatmul.f32.gmra.mxu0 %v88
  %v169 = vpop.f32.mrf.mxu0
  %v170 = vadd.f32 %v62, %v169
  %171 = vdwg.mxu0
  %v172 = vld [vmem:[%s3] sm:$0xff]
  %v173 = vld [vmem:[%s3 + $0x8] sm:$0xff]
  %v174 = vld [vmem:[%s3 + $0x10] sm:$0xff]
  %v175 = vld [vmem:[%s3 + $0x18] sm:$0xff]
  %v176 = vld [vmem:[%s3 + $0x20] sm:$0xff]
  %v177 = vld [vmem:[%s3 + $0x28] sm:$0xff]
  %v178 = vld [vmem:[%s3 + $0x30] sm:$0xff]
  %v179 = vld [vmem:[%s3 + $0x38] sm:$0xff]
  %v180 = vld [vmem:[%s3 + $0x40] sm:$0xff]
  %v181 = vld [vmem:[%s3 + $0x48] sm:$0xff]
  %v182 = vld [vmem:[%s3 + $0x50] sm:$0xff]
  %v183 = vld [vmem:[%s3 + $0x58] sm:$0xff]
  %v184 = vld [vmem:[%s3 + $0x60] sm:$0xff]
  %v185 = vld [vmem:[%s3 + $0x68] sm:$0xff]
  %v186 = vld [vmem:[%s3 + $0x70] sm:$0xff]
  %v187 = vld [vmem:[%s3 + $0x78] sm:$0xff]
  %v188 = vld [vmem:[%s4] sm:$0xff]
  %v189 = vld [vmem:[%s5] sm:$0xff]
  %v190 = vlaneseq
  %v191 = vand.u32 %v190, 127
  %v192 = vadd.s32 %v191, 128
  %vm193 = vcmp.ge.s32.totalorder %v191, 128
  %vm194 = vcmp.ge.s32.totalorder %v192, 128
  %vm195 = vcmp.lt.s32.totalorder %v191, 192
  %vm196 = vcmp.lt.s32.totalorder %v192, 192
  %vm197 = vmand %vm193, %vm195
  %vm198 = vmand %vm194, %vm196
  %v199 = vsel %vm197, 1.0, 0.5
  %v200 = vsel %vm198, 1.0, 0.5
  %v202 = vsel %vm65, 0.0, 0
  %204 = vmatpush.msra.mxu0 0.0
  %205 = vmatpush.msra.mxu0 0.0
  %206 = vmatpush.msra.mxu0 0.0
  %207 = vmatpush.msra.mxu0 0.0
  %208 = vmatpush.msra.mxu0 0.0
  %209 = vmatpush.msra.mxu0 0.0
  %210 = vmatpush.msra.mxu0 0.0
  %211 = vmatpush.msra.mxu0 0.0
  %212 = vmatpush.msra.mxu0 %v186
  %213 = vmatpush.msra.mxu0 %v184
  %214 = vmatpush.msra.mxu0 %v182
  %215 = vmatpush.msra.mxu0 %v180
  %216 = vmatpush.msra.mxu0 %v178
  %217 = vmatpush.msra.mxu0 %v176
  %218 = vmatpush.msra.mxu0 %v174
  %219 = vmatpush.msra.mxu0 %v172
  %220 = vmatmul.f32.gmra.mxu0 %v202
  %v221 = vpop.f32.mrf.mxu0
  %v222 = vadd.f32 %v108, %v221
  %223 = vdwg.mxu0
  %224 = vmatpush.msra.mxu0 0.0
  %225 = vmatpush.msra.mxu0 0.0
  %226 = vmatpush.msra.mxu0 0.0
  %227 = vmatpush.msra.mxu0 0.0
  %228 = vmatpush.msra.mxu0 0.0
  %229 = vmatpush.msra.mxu0 0.0
  %230 = vmatpush.msra.mxu0 0.0
  %231 = vmatpush.msra.mxu0 0.0
  %232 = vmatpush.msra.mxu0 %v187
  %233 = vmatpush.msra.mxu0 %v185
  %234 = vmatpush.msra.mxu0 %v183
  %235 = vmatpush.msra.mxu0 %v181
  %236 = vmatpush.msra.mxu0 %v179
  %237 = vmatpush.msra.mxu0 %v177
  %238 = vmatpush.msra.mxu0 %v175
  %239 = vmatpush.msra.mxu0 %v173
  %240 = vmatmul.f32.gmra.mxu0 %v202
  %v241 = vpop.f32.mrf.mxu0
  %v242 = vadd.f32 %v149, %v241
  %243 = vdwg.mxu0
  %v244 = vmul.f32 %v222, %v199
  %v245 = vmul.f32 %v242, %v200
  %v246 = vtanh.pop %v244
  %v247 = vtanh.pop %v245
  %v248 = vmul.f32 %v246, 0.5
  %v249 = vmul.f32 %v247, 0.5
  %v250 = vadd.f32 %v248, 0.5
  %v251 = vadd.f32 %v249, 0.5
  %v252 = vsel %vm197, %v246, %v250
  %v253 = vsel %vm198, %v247, %v251
  %v254 = vmul.f32 %v252, 0.0
  %v255 = vmul.f32 %v252, %v253
  %257 = vrot.lane.b32.xlu0 %v255, 64
  %v258 = vpop.permute.xlu0 %257
  %v260 = vadd.f32 %v254, %v258
  %v261 = vtanh.pop %v260
  %v262 = vmul.f32 %v253, %v261
  %264 = vset.pattern.permute.xlu0 0
  %265 = vperm.xlu0 %264, %v188
  %v266 = vpop.permute.xlu0 %265
  %v268 = vmul.f32 %v266, %v262
  %v269 = vadd.f32 %v268, 0.0
  %270 = vset.pattern.permute.xlu0 7
  %271 = vperm.xlu0 %270, %v188
  %v272 = vpop.permute.xlu0 %271
  %v274 = vmul.f32 %v272, %v262
  %v275 = vadd.f32 %v274, 0.0
  %277 = vset.pattern.permute.xlu0 0
  %278 = vperm.xlu0 %277, %v189
  %v279 = vpop.permute.xlu0 %278
  %v281 = vmul.f32 %v279, %v262
  %v282 = vadd.f32 %v281, 0.0
  %283 = vset.pattern.permute.xlu0 7
  %284 = vperm.xlu0 %283, %v189
  %v285 = vpop.permute.xlu0 %284
  %v287 = vmul.f32 %v285, %v262
  %v288 = vadd.f32 %v287, 0.0
  %290 = vrot.lane.b32.xlu0 %v262, 64
  %v291 = vpop.permute.xlu0 %290
  %v292 = vsel %vm65, %v291, 0
  %294 = vmatpush.msra.mxu0 0.0
  %295 = vmatpush.msra.mxu0 0.0
  %296 = vmatpush.msra.mxu0 0.0
  %297 = vmatpush.msra.mxu0 0.0
  %298 = vmatpush.msra.mxu0 0.0
  %299 = vmatpush.msra.mxu0 0.0
  %300 = vmatpush.msra.mxu0 0.0
  %301 = vmatpush.msra.mxu0 0.0
  %302 = vmatpush.msra.mxu0 %v186
  %303 = vmatpush.msra.mxu0 %v184
  %304 = vmatpush.msra.mxu0 %v182
  %305 = vmatpush.msra.mxu0 %v180
  %306 = vmatpush.msra.mxu0 %v178
  %307 = vmatpush.msra.mxu0 %v176
  %308 = vmatpush.msra.mxu0 %v174
  %309 = vmatpush.msra.mxu0 %v172
  %310 = vmatmul.f32.gmra.mxu0 %v292
  %v311 = vpop.f32.mrf.mxu0
  %v312 = vadd.f32 %v111, %v311
  %313 = vdwg.mxu0
  %314 = vmatpush.msra.mxu0 0.0
  %315 = vmatpush.msra.mxu0 0.0
  %316 = vmatpush.msra.mxu0 0.0
  %317 = vmatpush.msra.mxu0 0.0
  %318 = vmatpush.msra.mxu0 0.0
  %319 = vmatpush.msra.mxu0 0.0
  %320 = vmatpush.msra.mxu0 0.0
  %321 = vmatpush.msra.mxu0 0.0
  %322 = vmatpush.msra.mxu0 %v187
  %323 = vmatpush.msra.mxu0 %v185
  %324 = vmatpush.msra.mxu0 %v183
  %325 = vmatpush.msra.mxu0 %v181
  %326 = vmatpush.msra.mxu0 %v179
  %327 = vmatpush.msra.mxu0 %v177
  %328 = vmatpush.msra.mxu0 %v175
  %329 = vmatpush.msra.mxu0 %v173
  %330 = vmatmul.f32.gmra.mxu0 %v292
  %v331 = vpop.f32.mrf.mxu0
  %v332 = vadd.f32 %v152, %v331
  %333 = vdwg.mxu0
  %v334 = vmul.f32 %v312, %v199
  %v335 = vmul.f32 %v332, %v200
  %v336 = vtanh.pop %v334
  %v337 = vtanh.pop %v335
  %v338 = vmul.f32 %v336, 0.5
  %v339 = vmul.f32 %v337, 0.5
  %v340 = vadd.f32 %v338, 0.5
  %v341 = vadd.f32 %v339, 0.5
  %v342 = vsel %vm197, %v336, %v340
  %v343 = vsel %vm198, %v337, %v341
  %v344 = vmul.f32 %v342, %v260
  %v345 = vmul.f32 %v342, %v343
  %347 = vrot.lane.b32.xlu0 %v345, 64
  %v348 = vpop.permute.xlu0 %347
  %v350 = vadd.f32 %v344, %v348
  %v351 = vtanh.pop %v350
  %v352 = vmul.f32 %v343, %v351
  %353 = vset.pattern.permute.xlu0 1
  %354 = vperm.xlu0 %353, %v188
  %v355 = vpop.permute.xlu0 %354
  %v357 = vmul.f32 %v355, %v352
  %v358 = vadd.f32 %v269, %v357
  %359 = vset.pattern.permute.xlu0 6
  %360 = vperm.xlu0 %359, %v188
  %v361 = vpop.permute.xlu0 %360
  %v363 = vmul.f32 %v361, %v352
  %v364 = vadd.f32 %v275, %v363
  %365 = vset.pattern.permute.xlu0 1
  %366 = vperm.xlu0 %365, %v189
  %v367 = vpop.permute.xlu0 %366
  %v369 = vmul.f32 %v367, %v352
  %v370 = vadd.f32 %v282, %v369
  %371 = vset.pattern.permute.xlu0 6
  %372 = vperm.xlu0 %371, %v189
  %v373 = vpop.permute.xlu0 %372
  %v375 = vmul.f32 %v373, %v352
  %v376 = vadd.f32 %v288, %v375
  %378 = vrot.lane.b32.xlu0 %v352, 64
  %v379 = vpop.permute.xlu0 %378
  %v380 = vsel %vm65, %v379, 0
  %382 = vmatpush.msra.mxu0 0.0
  %383 = vmatpush.msra.mxu0 0.0
  %384 = vmatpush.msra.mxu0 0.0
  %385 = vmatpush.msra.mxu0 0.0
  %386 = vmatpush.msra.mxu0 0.0
  %387 = vmatpush.msra.mxu0 0.0
  %388 = vmatpush.msra.mxu0 0.0
  %389 = vmatpush.msra.mxu0 0.0
  %390 = vmatpush.msra.mxu0 %v186
  %391 = vmatpush.msra.mxu0 %v184
  %392 = vmatpush.msra.mxu0 %v182
  %393 = vmatpush.msra.mxu0 %v180
  %394 = vmatpush.msra.mxu0 %v178
  %395 = vmatpush.msra.mxu0 %v176
  %396 = vmatpush.msra.mxu0 %v174
  %397 = vmatpush.msra.mxu0 %v172
  %398 = vmatmul.f32.gmra.mxu0 %v380
  %v399 = vpop.f32.mrf.mxu0
  %v400 = vadd.f32 %v114, %v399
  %401 = vdwg.mxu0
  %402 = vmatpush.msra.mxu0 0.0
  %403 = vmatpush.msra.mxu0 0.0
  %404 = vmatpush.msra.mxu0 0.0
  %405 = vmatpush.msra.mxu0 0.0
  %406 = vmatpush.msra.mxu0 0.0
  %407 = vmatpush.msra.mxu0 0.0
  %408 = vmatpush.msra.mxu0 0.0
  %409 = vmatpush.msra.mxu0 0.0
  %410 = vmatpush.msra.mxu0 %v187
  %411 = vmatpush.msra.mxu0 %v185
  %412 = vmatpush.msra.mxu0 %v183
  %413 = vmatpush.msra.mxu0 %v181
  %414 = vmatpush.msra.mxu0 %v179
  %415 = vmatpush.msra.mxu0 %v177
  %416 = vmatpush.msra.mxu0 %v175
  %417 = vmatpush.msra.mxu0 %v173
  %418 = vmatmul.f32.gmra.mxu0 %v380
  %v419 = vpop.f32.mrf.mxu0
  %v420 = vadd.f32 %v155, %v419
  %421 = vdwg.mxu0
  %v422 = vmul.f32 %v400, %v199
  %v423 = vmul.f32 %v420, %v200
  %v424 = vtanh.pop %v422
  %v425 = vtanh.pop %v423
  %v426 = vmul.f32 %v424, 0.5
  %v427 = vmul.f32 %v425, 0.5
  %v428 = vadd.f32 %v426, 0.5
  %v429 = vadd.f32 %v427, 0.5
  %v430 = vsel %vm197, %v424, %v428
  %v431 = vsel %vm198, %v425, %v429
  %v432 = vmul.f32 %v430, %v350
  %v433 = vmul.f32 %v430, %v431
  %435 = vrot.lane.b32.xlu0 %v433, 64
  %v436 = vpop.permute.xlu0 %435
  %v438 = vadd.f32 %v432, %v436
  %v439 = vtanh.pop %v438
  %v440 = vmul.f32 %v431, %v439
  %441 = vset.pattern.permute.xlu0 2
  %442 = vperm.xlu0 %441, %v188
  %v443 = vpop.permute.xlu0 %442
  %v445 = vmul.f32 %v443, %v440
  %v446 = vadd.f32 %v358, %v445
  %447 = vset.pattern.permute.xlu0 5
  %448 = vperm.xlu0 %447, %v188
  %v449 = vpop.permute.xlu0 %448
  %v451 = vmul.f32 %v449, %v440
  %v452 = vadd.f32 %v364, %v451
  %453 = vset.pattern.permute.xlu0 2
  %454 = vperm.xlu0 %453, %v189
  %v455 = vpop.permute.xlu0 %454
  %v457 = vmul.f32 %v455, %v440
  %v458 = vadd.f32 %v370, %v457
  %459 = vset.pattern.permute.xlu0 5
  %460 = vperm.xlu0 %459, %v189
  %v461 = vpop.permute.xlu0 %460
  %v463 = vmul.f32 %v461, %v440
  %v464 = vadd.f32 %v376, %v463
  %466 = vrot.lane.b32.xlu0 %v440, 64
  %v467 = vpop.permute.xlu0 %466
  %v468 = vsel %vm65, %v467, 0
  %470 = vmatpush.msra.mxu0 0.0
  %471 = vmatpush.msra.mxu0 0.0
  %472 = vmatpush.msra.mxu0 0.0
  %473 = vmatpush.msra.mxu0 0.0
  %474 = vmatpush.msra.mxu0 0.0
  %475 = vmatpush.msra.mxu0 0.0
  %476 = vmatpush.msra.mxu0 0.0
  %477 = vmatpush.msra.mxu0 0.0
  %478 = vmatpush.msra.mxu0 %v186
  %479 = vmatpush.msra.mxu0 %v184
  %480 = vmatpush.msra.mxu0 %v182
  %481 = vmatpush.msra.mxu0 %v180
  %482 = vmatpush.msra.mxu0 %v178
  %483 = vmatpush.msra.mxu0 %v176
  %484 = vmatpush.msra.mxu0 %v174
  %485 = vmatpush.msra.mxu0 %v172
  %486 = vmatmul.f32.gmra.mxu0 %v468
  %v487 = vpop.f32.mrf.mxu0
  %v488 = vadd.f32 %v117, %v487
  %489 = vdwg.mxu0
  %490 = vmatpush.msra.mxu0 0.0
  %491 = vmatpush.msra.mxu0 0.0
  %492 = vmatpush.msra.mxu0 0.0
  %493 = vmatpush.msra.mxu0 0.0
  %494 = vmatpush.msra.mxu0 0.0
  %495 = vmatpush.msra.mxu0 0.0
  %496 = vmatpush.msra.mxu0 0.0
  %497 = vmatpush.msra.mxu0 0.0
  %498 = vmatpush.msra.mxu0 %v187
  %499 = vmatpush.msra.mxu0 %v185
  %500 = vmatpush.msra.mxu0 %v183
  %501 = vmatpush.msra.mxu0 %v181
  %502 = vmatpush.msra.mxu0 %v179
  %503 = vmatpush.msra.mxu0 %v177
  %504 = vmatpush.msra.mxu0 %v175
  %505 = vmatpush.msra.mxu0 %v173
  %506 = vmatmul.f32.gmra.mxu0 %v468
  %v507 = vpop.f32.mrf.mxu0
  %v508 = vadd.f32 %v158, %v507
  %509 = vdwg.mxu0
  %v510 = vmul.f32 %v488, %v199
  %v511 = vmul.f32 %v508, %v200
  %v512 = vtanh.pop %v510
  %v513 = vtanh.pop %v511
  %v514 = vmul.f32 %v512, 0.5
  %v515 = vmul.f32 %v513, 0.5
  %v516 = vadd.f32 %v514, 0.5
  %v517 = vadd.f32 %v515, 0.5
  %v518 = vsel %vm197, %v512, %v516
  %v519 = vsel %vm198, %v513, %v517
  %v520 = vmul.f32 %v518, %v438
  %v521 = vmul.f32 %v518, %v519
  %523 = vrot.lane.b32.xlu0 %v521, 64
  %v524 = vpop.permute.xlu0 %523
  %v526 = vadd.f32 %v520, %v524
  %v527 = vtanh.pop %v526
  %v528 = vmul.f32 %v519, %v527
  %529 = vset.pattern.permute.xlu0 3
  %530 = vperm.xlu0 %529, %v188
  %v531 = vpop.permute.xlu0 %530
  %v533 = vmul.f32 %v531, %v528
  %v534 = vadd.f32 %v446, %v533
  %535 = vset.pattern.permute.xlu0 4
  %536 = vperm.xlu0 %535, %v188
  %v537 = vpop.permute.xlu0 %536
  %v539 = vmul.f32 %v537, %v528
  %v540 = vadd.f32 %v452, %v539
  %541 = vset.pattern.permute.xlu0 3
  %542 = vperm.xlu0 %541, %v189
  %v543 = vpop.permute.xlu0 %542
  %v545 = vmul.f32 %v543, %v528
  %v546 = vadd.f32 %v458, %v545
  %547 = vset.pattern.permute.xlu0 4
  %548 = vperm.xlu0 %547, %v189
  %v549 = vpop.permute.xlu0 %548
  %v551 = vmul.f32 %v549, %v528
  %v552 = vadd.f32 %v464, %v551
  %554 = vrot.lane.b32.xlu0 %v528, 64
  %v555 = vpop.permute.xlu0 %554
  %v556 = vsel %vm65, %v555, 0
  %558 = vmatpush.msra.mxu0 0.0
  %559 = vmatpush.msra.mxu0 0.0
  %560 = vmatpush.msra.mxu0 0.0
  %561 = vmatpush.msra.mxu0 0.0
  %562 = vmatpush.msra.mxu0 0.0
  %563 = vmatpush.msra.mxu0 0.0
  %564 = vmatpush.msra.mxu0 0.0
  %565 = vmatpush.msra.mxu0 0.0
  %566 = vmatpush.msra.mxu0 %v186
  %567 = vmatpush.msra.mxu0 %v184
  %568 = vmatpush.msra.mxu0 %v182
  %569 = vmatpush.msra.mxu0 %v180
  %570 = vmatpush.msra.mxu0 %v178
  %571 = vmatpush.msra.mxu0 %v176
  %572 = vmatpush.msra.mxu0 %v174
  %573 = vmatpush.msra.mxu0 %v172
  %574 = vmatmul.f32.gmra.mxu0 %v556
  %v575 = vpop.f32.mrf.mxu0
  %v576 = vadd.f32 %v120, %v575
  %577 = vdwg.mxu0
  %578 = vmatpush.msra.mxu0 0.0
  %579 = vmatpush.msra.mxu0 0.0
  %580 = vmatpush.msra.mxu0 0.0
  %581 = vmatpush.msra.mxu0 0.0
  %582 = vmatpush.msra.mxu0 0.0
  %583 = vmatpush.msra.mxu0 0.0
  %584 = vmatpush.msra.mxu0 0.0
  %585 = vmatpush.msra.mxu0 0.0
  %586 = vmatpush.msra.mxu0 %v187
  %587 = vmatpush.msra.mxu0 %v185
  %588 = vmatpush.msra.mxu0 %v183
  %589 = vmatpush.msra.mxu0 %v181
  %590 = vmatpush.msra.mxu0 %v179
  %591 = vmatpush.msra.mxu0 %v177
  %592 = vmatpush.msra.mxu0 %v175
  %593 = vmatpush.msra.mxu0 %v173
  %594 = vmatmul.f32.gmra.mxu0 %v556
  %v595 = vpop.f32.mrf.mxu0
  %v596 = vadd.f32 %v161, %v595
  %597 = vdwg.mxu0
  %v598 = vmul.f32 %v576, %v199
  %v599 = vmul.f32 %v596, %v200
  %v600 = vtanh.pop %v598
  %v601 = vtanh.pop %v599
  %v602 = vmul.f32 %v600, 0.5
  %v603 = vmul.f32 %v601, 0.5
  %v604 = vadd.f32 %v602, 0.5
  %v605 = vadd.f32 %v603, 0.5
  %v606 = vsel %vm197, %v600, %v604
  %v607 = vsel %vm198, %v601, %v605
  %v608 = vmul.f32 %v606, %v526
  %v609 = vmul.f32 %v606, %v607
  %611 = vrot.lane.b32.xlu0 %v609, 64
  %v612 = vpop.permute.xlu0 %611
  %v614 = vadd.f32 %v608, %v612
  %v615 = vtanh.pop %v614
  %v616 = vmul.f32 %v607, %v615
  %v617 = vmul.f32 %v537, %v616
  %v618 = vadd.f32 %v534, %v617
  %v619 = vmul.f32 %v531, %v616
  %v620 = vadd.f32 %v540, %v619
  %v621 = vmul.f32 %v549, %v616
  %v622 = vadd.f32 %v546, %v621
  %v623 = vmul.f32 %v543, %v616
  %v624 = vadd.f32 %v552, %v623
  %626 = vrot.lane.b32.xlu0 %v616, 64
  %v627 = vpop.permute.xlu0 %626
  %v628 = vsel %vm65, %v627, 0
  %630 = vmatpush.msra.mxu0 0.0
  %631 = vmatpush.msra.mxu0 0.0
  %632 = vmatpush.msra.mxu0 0.0
  %633 = vmatpush.msra.mxu0 0.0
  %634 = vmatpush.msra.mxu0 0.0
  %635 = vmatpush.msra.mxu0 0.0
  %636 = vmatpush.msra.mxu0 0.0
  %637 = vmatpush.msra.mxu0 0.0
  %638 = vmatpush.msra.mxu0 %v186
  %639 = vmatpush.msra.mxu0 %v184
  %640 = vmatpush.msra.mxu0 %v182
  %641 = vmatpush.msra.mxu0 %v180
  %642 = vmatpush.msra.mxu0 %v178
  %643 = vmatpush.msra.mxu0 %v176
  %644 = vmatpush.msra.mxu0 %v174
  %645 = vmatpush.msra.mxu0 %v172
  %646 = vmatmul.f32.gmra.mxu0 %v628
  %v647 = vpop.f32.mrf.mxu0
  %v648 = vadd.f32 %v123, %v647
  %649 = vdwg.mxu0
  %650 = vmatpush.msra.mxu0 0.0
  %651 = vmatpush.msra.mxu0 0.0
  %652 = vmatpush.msra.mxu0 0.0
  %653 = vmatpush.msra.mxu0 0.0
  %654 = vmatpush.msra.mxu0 0.0
  %655 = vmatpush.msra.mxu0 0.0
  %656 = vmatpush.msra.mxu0 0.0
  %657 = vmatpush.msra.mxu0 0.0
  %658 = vmatpush.msra.mxu0 %v187
  %659 = vmatpush.msra.mxu0 %v185
  %660 = vmatpush.msra.mxu0 %v183
  %661 = vmatpush.msra.mxu0 %v181
  %662 = vmatpush.msra.mxu0 %v179
  %663 = vmatpush.msra.mxu0 %v177
  %664 = vmatpush.msra.mxu0 %v175
  %665 = vmatpush.msra.mxu0 %v173
  %666 = vmatmul.f32.gmra.mxu0 %v628
  %v667 = vpop.f32.mrf.mxu0
  %v668 = vadd.f32 %v164, %v667
  %669 = vdwg.mxu0
  %v670 = vmul.f32 %v648, %v199
  %v671 = vmul.f32 %v668, %v200
  %v672 = vtanh.pop %v670
  %v673 = vtanh.pop %v671
  %v674 = vmul.f32 %v672, 0.5
  %v675 = vmul.f32 %v673, 0.5
  %v676 = vadd.f32 %v674, 0.5
  %v677 = vadd.f32 %v675, 0.5
  %v678 = vsel %vm197, %v672, %v676
  %v679 = vsel %vm198, %v673, %v677
  %v680 = vmul.f32 %v678, %v614
  %v681 = vmul.f32 %v678, %v679
  %683 = vrot.lane.b32.xlu0 %v681, 64
  %v684 = vpop.permute.xlu0 %683
  %v686 = vadd.f32 %v680, %v684
  %v687 = vtanh.pop %v686
  %v688 = vmul.f32 %v679, %v687
  %v689 = vmul.f32 %v449, %v688
  %v690 = vadd.f32 %v618, %v689
  %v691 = vmul.f32 %v443, %v688
  %v692 = vadd.f32 %v620, %v691
  %v693 = vmul.f32 %v461, %v688
  %v694 = vadd.f32 %v622, %v693
  %v695 = vmul.f32 %v455, %v688
  %v696 = vadd.f32 %v624, %v695
  %698 = vrot.lane.b32.xlu0 %v688, 64
  %v699 = vpop.permute.xlu0 %698
  %v700 = vsel %vm65, %v699, 0
  %702 = vmatpush.msra.mxu0 0.0
  %703 = vmatpush.msra.mxu0 0.0
  %704 = vmatpush.msra.mxu0 0.0
  %705 = vmatpush.msra.mxu0 0.0
  %706 = vmatpush.msra.mxu0 0.0
  %707 = vmatpush.msra.mxu0 0.0
  %708 = vmatpush.msra.mxu0 0.0
  %709 = vmatpush.msra.mxu0 0.0
  %710 = vmatpush.msra.mxu0 %v186
  %711 = vmatpush.msra.mxu0 %v184
  %712 = vmatpush.msra.mxu0 %v182
  %713 = vmatpush.msra.mxu0 %v180
  %714 = vmatpush.msra.mxu0 %v178
  %715 = vmatpush.msra.mxu0 %v176
  %716 = vmatpush.msra.mxu0 %v174
  %717 = vmatpush.msra.mxu0 %v172
  %718 = vmatmul.f32.gmra.mxu0 %v700
  %v719 = vpop.f32.mrf.mxu0
  %v720 = vadd.f32 %v126, %v719
  %721 = vdwg.mxu0
  %722 = vmatpush.msra.mxu0 0.0
  %723 = vmatpush.msra.mxu0 0.0
  %724 = vmatpush.msra.mxu0 0.0
  %725 = vmatpush.msra.mxu0 0.0
  %726 = vmatpush.msra.mxu0 0.0
  %727 = vmatpush.msra.mxu0 0.0
  %728 = vmatpush.msra.mxu0 0.0
  %729 = vmatpush.msra.mxu0 0.0
  %730 = vmatpush.msra.mxu0 %v187
  %731 = vmatpush.msra.mxu0 %v185
  %732 = vmatpush.msra.mxu0 %v183
  %733 = vmatpush.msra.mxu0 %v181
  %734 = vmatpush.msra.mxu0 %v179
  %735 = vmatpush.msra.mxu0 %v177
  %736 = vmatpush.msra.mxu0 %v175
  %737 = vmatpush.msra.mxu0 %v173
  %738 = vmatmul.f32.gmra.mxu0 %v700
  %v739 = vpop.f32.mrf.mxu0
  %v740 = vadd.f32 %v167, %v739
  %741 = vdwg.mxu0
  %v742 = vmul.f32 %v720, %v199
  %v743 = vmul.f32 %v740, %v200
  %v744 = vtanh.pop %v742
  %v745 = vtanh.pop %v743
  %v746 = vmul.f32 %v744, 0.5
  %v747 = vmul.f32 %v745, 0.5
  %v748 = vadd.f32 %v746, 0.5
  %v749 = vadd.f32 %v747, 0.5
  %v750 = vsel %vm197, %v744, %v748
  %v751 = vsel %vm198, %v745, %v749
  %v752 = vmul.f32 %v750, %v686
  %v753 = vmul.f32 %v750, %v751
  %755 = vrot.lane.b32.xlu0 %v753, 64
  %v756 = vpop.permute.xlu0 %755
  %v758 = vadd.f32 %v752, %v756
  %v759 = vtanh.pop %v758
  %v760 = vmul.f32 %v751, %v759
  %v761 = vmul.f32 %v361, %v760
  %v762 = vadd.f32 %v690, %v761
  %v763 = vmul.f32 %v355, %v760
  %v764 = vadd.f32 %v692, %v763
  %v765 = vmul.f32 %v373, %v760
  %v766 = vadd.f32 %v694, %v765
  %v767 = vmul.f32 %v367, %v760
  %v768 = vadd.f32 %v696, %v767
  %770 = vrot.lane.b32.xlu0 %v760, 64
  %v771 = vpop.permute.xlu0 %770
  %v772 = vsel %vm65, %v771, 0
  %774 = vmatpush.msra.mxu0 0.0
  %775 = vmatpush.msra.mxu0 0.0
  %776 = vmatpush.msra.mxu0 0.0
  %777 = vmatpush.msra.mxu0 0.0
  %778 = vmatpush.msra.mxu0 0.0
  %779 = vmatpush.msra.mxu0 0.0
  %780 = vmatpush.msra.mxu0 0.0
  %781 = vmatpush.msra.mxu0 0.0
  %782 = vmatpush.msra.mxu0 %v186
  %783 = vmatpush.msra.mxu0 %v184
  %784 = vmatpush.msra.mxu0 %v182
  %785 = vmatpush.msra.mxu0 %v180
  %786 = vmatpush.msra.mxu0 %v178
  %787 = vmatpush.msra.mxu0 %v176
  %788 = vmatpush.msra.mxu0 %v174
  %789 = vmatpush.msra.mxu0 %v172
  %790 = vmatmul.f32.gmra.mxu0 %v772
  %v791 = vpop.f32.mrf.mxu0
  %v792 = vadd.f32 %v129, %v791
  %793 = vdwg.mxu0
  %794 = vmatpush.msra.mxu0 0.0
  %795 = vmatpush.msra.mxu0 0.0
  %796 = vmatpush.msra.mxu0 0.0
  %797 = vmatpush.msra.mxu0 0.0
  %798 = vmatpush.msra.mxu0 0.0
  %799 = vmatpush.msra.mxu0 0.0
  %800 = vmatpush.msra.mxu0 0.0
  %801 = vmatpush.msra.mxu0 0.0
  %802 = vmatpush.msra.mxu0 %v187
  %803 = vmatpush.msra.mxu0 %v185
  %804 = vmatpush.msra.mxu0 %v183
  %805 = vmatpush.msra.mxu0 %v181
  %806 = vmatpush.msra.mxu0 %v179
  %807 = vmatpush.msra.mxu0 %v177
  %808 = vmatpush.msra.mxu0 %v175
  %809 = vmatpush.msra.mxu0 %v173
  %810 = vmatmul.f32.gmra.mxu0 %v772
  %v811 = vpop.f32.mrf.mxu0
  %v812 = vadd.f32 %v170, %v811
  %813 = vdwg.mxu0
  %v814 = vmul.f32 %v792, %v199
  %v815 = vmul.f32 %v812, %v200
  %v816 = vtanh.pop %v814
  %v817 = vtanh.pop %v815
  %v818 = vmul.f32 %v816, 0.5
  %v819 = vmul.f32 %v817, 0.5
  %v820 = vadd.f32 %v818, 0.5
  %v821 = vadd.f32 %v819, 0.5
  %v822 = vsel %vm197, %v816, %v820
  %v823 = vsel %vm198, %v817, %v821
  %v824 = vmul.f32 %v822, %v758
  %v825 = vmul.f32 %v822, %v823
  %827 = vrot.lane.b32.xlu0 %v825, 64
  %v828 = vpop.permute.xlu0 %827
  %v830 = vadd.f32 %v824, %v828
  %v831 = vtanh.pop %v830
  %v832 = vmul.f32 %v823, %v831
  %v833 = vmul.f32 %v272, %v832
  %v834 = vadd.f32 %v762, %v833
  %v835 = vmul.f32 %v266, %v832
  %v836 = vadd.f32 %v764, %v835
  %v837 = vmul.f32 %v285, %v832
  %v838 = vadd.f32 %v766, %v837
  %v839 = vmul.f32 %v279, %v832
  %v840 = vadd.f32 %v768, %v839
  %842 = vrot.lane.b32.xlu0 %v834, 64
  %v843 = vpop.permute.xlu0 %842
  %846 = vrot.lane.b32.xlu0 %v836, 64
  %v847 = vpop.permute.xlu0 %846
  %vm849 = vcmask 261120
  %v850 = vsel %vm849, %v843, %v847
  %v851 = vsel %vm65, %v850, %v838
  %vm852 = vcmask 785408
  %v853 = vsel %vm852, %v851, %v840
  %v854 = vld [vmem:[%s6] sm:$0xff]
  %v855 = vld [vmem:[%s6 + $0x8] sm:$0xff]
  %v856 = vld [vmem:[%s6 + $0x10] sm:$0xff]
  %v857 = vld [vmem:[%s6 + $0x18] sm:$0xff]
  %v858 = vld [vmem:[%s6 + $0x20] sm:$0xff]
  %v859 = vld [vmem:[%s6 + $0x28] sm:$0xff]
  %v860 = vld [vmem:[%s6 + $0x30] sm:$0xff]
  %v861 = vld [vmem:[%s6 + $0x38] sm:$0xff]
  %v862 = vld [vmem:[%s6 + $0x40] sm:$0xff]
  %v863 = vld [vmem:[%s6 + $0x48] sm:$0xff]
  %v864 = vld [vmem:[%s6 + $0x50] sm:$0xff]
  %v865 = vld [vmem:[%s6 + $0x58] sm:$0xff]
  %v866 = vld [vmem:[%s6 + $0x60] sm:$0xff]
  %v867 = vld [vmem:[%s6 + $0x68] sm:$0xff]
  %v868 = vld [vmem:[%s6 + $0x70] sm:$0xff]
  %v869 = vld [vmem:[%s6 + $0x78] sm:$0xff]
  %v870 = vld [vmem:[%s7] sm:$0x1]
  %v872 = vperm.slane %v870, 0
  %874 = vmatpush.msra.mxu0 %v869
  %875 = vmatpush.msra.mxu0 %v868
  %876 = vmatpush.msra.mxu0 %v867
  %877 = vmatpush.msra.mxu0 %v866
  %878 = vmatpush.msra.mxu0 %v865
  %879 = vmatpush.msra.mxu0 %v864
  %880 = vmatpush.msra.mxu0 %v863
  %881 = vmatpush.msra.mxu0 %v862
  %882 = vmatpush.msra.mxu0 %v861
  %883 = vmatpush.msra.mxu0 %v860
  %884 = vmatpush.msra.mxu0 %v859
  %885 = vmatpush.msra.mxu0 %v858
  %886 = vmatpush.msra.mxu0 %v857
  %887 = vmatpush.msra.mxu0 %v856
  %888 = vmatpush.msra.mxu0 %v855
  %889 = vmatpush.msra.mxu0 %v854
  %890 = vmatmul.f32.gmra.mxu0 %v853
  %v891 = vpop.f32.mrf.mxu0
  %v892 = vadd.f32 %v872, %v891
  %893 = vdwg.mxu0
  %v894 = vtanh.pop %v892
  %v895 = vld [vmem:[%s8] sm:$0xff]
  %v896 = vld [vmem:[%s8 + $0x8] sm:$0xff]
  %v897 = vld [vmem:[%s8 + $0x10] sm:$0xff]
  %v898 = vld [vmem:[%s8 + $0x18] sm:$0xff]
  %v899 = vld [vmem:[%s8 + $0x20] sm:$0xff]
  %v900 = vld [vmem:[%s8 + $0x28] sm:$0xff]
  %v901 = vld [vmem:[%s8 + $0x30] sm:$0xff]
  %v902 = vld [vmem:[%s8 + $0x38] sm:$0xff]
  %v903 = vld [vmem:[%s8 + $0x40] sm:$0xff]
  %v904 = vld [vmem:[%s8 + $0x48] sm:$0xff]
  %v905 = vld [vmem:[%s8 + $0x50] sm:$0xff]
  %v906 = vld [vmem:[%s8 + $0x58] sm:$0xff]
  %v907 = vld [vmem:[%s8 + $0x60] sm:$0xff]
  %v908 = vld [vmem:[%s8 + $0x68] sm:$0xff]
  %v909 = vld [vmem:[%s8 + $0x70] sm:$0xff]
  %v910 = vld [vmem:[%s8 + $0x78] sm:$0xff]
  %v911 = vld [vmem:[%s9] sm:$0x1]
  %v913 = vperm.slane %v911, 0
  %915 = vmatpush.msra.mxu0 %v910
  %916 = vmatpush.msra.mxu0 %v909
  %917 = vmatpush.msra.mxu0 %v908
  %918 = vmatpush.msra.mxu0 %v907
  %919 = vmatpush.msra.mxu0 %v906
  %920 = vmatpush.msra.mxu0 %v905
  %921 = vmatpush.msra.mxu0 %v904
  %922 = vmatpush.msra.mxu0 %v903
  %923 = vmatpush.msra.mxu0 %v902
  %924 = vmatpush.msra.mxu0 %v901
  %925 = vmatpush.msra.mxu0 %v900
  %926 = vmatpush.msra.mxu0 %v899
  %927 = vmatpush.msra.mxu0 %v898
  %928 = vmatpush.msra.mxu0 %v897
  %929 = vmatpush.msra.mxu0 %v896
  %930 = vmatpush.msra.mxu0 %v895
  %931 = vmatmul.f32.gmra.mxu0 %v894
  %v932 = vpop.f32.mrf.mxu0
  %v933 = vadd.f32 %v913, %v932
  %934 = vdwg.mxu0
  %935 = vst [vmem:[%s10] sm:$0xff] %v933
  // Predicated region
  $region42: #{network_forward.1} parent=0 // pred_check
    _
  $region43: #{network_forward.1} parent=0 // pred_check_branch
    %937 = sbr.rel (0) target = $region45
  $region44: #{network_forward.1} parent=0 // pred_region
    _
  $region45: #{network_forward.1} parent=0 // pred_fallthru
    _
  // Predicated region
  $region46: #{network_forward.1} parent=0 // pred_check
    _
  $region47: #{network_forward.1} parent=0 // pred_check_branch
    %939 = sbr.rel (0) target = $region49
  $region48: #{network_forward.1} parent=0 // pred_region
    _
  $region49: #{network_forward.1} parent=0 // pred_fallthru
    _

</llo_original>
